<compile_context>
chip_gen: v5e
topology: v5e:2x2
jax: 0.10.0
libtpu: 0.0.40
codegen_flags: <defaults>
</compile_context>

<pallas_src>
import jax
import jax.numpy as jnp
from jax import lax
from jax.experimental import pallas as pl
from jax.experimental.pallas import tpu as pltpu


def _mscn_tail_kernel(a3_ref, a5_ref, x_ref, w1t_ref, b1_ref, w2_ref, b2_ref, o_ref):
    """Fused ReLU-sum + channel attention + channel gate + residual.

    Block layout is (bt, C, HW): C on sublanes, HW on lanes.  The whole channel
    attention is done on the VPU/XLU with channels staying on the sublane axis,
    so the final gate is a plain lane-broadcast multiply (no relayout, no MXU).
    """
    # Conv-branch epilogues (per-channel biases already folded into the conv output).
    u = jnp.maximum(a3_ref[...], 0.0) + jnp.maximum(a5_ref[...], 0.0)     # (bt, C, HW)

    # AdaptiveAvgPool2d(1): lane reduction -> channels remain on sublanes.
    # (Review note: fusing this sum into the pass that builds `u` is a free trim
    #  only once the kernel stops being DMA-bound.)
    y = jnp.mean(u, axis=-1, keepdims=True)                               # (bt, C, 1)

    # 1x1 conv C -> Cr, + ReLU, on the VPU/XLU:
    #   h[b, j] = relu( sum_c y[b, c] * W1[j, c] + b1[j] )
    h = jnp.sum(y * w1t_ref[...][None, :, :], axis=1, keepdims=True)      # (bt, 1, Cr)
    h = jnp.maximum(h + b1_ref[...], 0.0)                                 # (bt, 1, Cr)

    # 1x1 conv Cr -> C, + sigmoid; result lands with channels on sublanes.
    #   s[b, c] = sigmoid( sum_j W2[c, j] * h[b, j] + b2[c] )
    s = jnp.sum(w2_ref[...][None, :, :] * h, axis=-1, keepdims=True)      # (bt, C, 1)
    s = jax.nn.sigmoid(s + b2_ref[...])                                   # (bt, C, 1)

    # Channel gate (lane broadcast) + residual.
    o_ref[...] = (u * s + x_ref[...]).astype(o_ref.dtype)


def _tensorcores_per_chip():
    """2 TensorCores per chip on v7x-class parts; 1 on v5e / v6e."""
    try:
        kind = jax.devices()[0].device_kind.lower()
    except Exception:
        return 1
    return 2 if "v7" in kind else 1


def mscn_block(x, w3, b3, w5, b5, w1, b1, w2, b2):
    """MSCN_Block forward.

    x: (B, C, H, W) f32; w3: (C, C, 3, 3); w5: (C, C, 5, 5); b3/b5: (C,);
    w1: (Cr, C); b1: (Cr,); w2: (C, Cr); b2: (C,)   (PyTorch Conv2d layouts).
    """
    B, C, H, W = x.shape
    HW = H * W
    Cr = w1.shape[0]
    dn = ("NCHW", "OIHW", "NCHW")

    a3 = lax.conv_general_dilated(x, w3, (1, 1), ((1, 1), (1, 1)), dimension_numbers=dn)
    a5 = lax.conv_general_dilated(x, w5, (1, 1), ((2, 2), (2, 2)), dimension_numbers=dn)
    # Fold the per-channel conv biases into the XLA conv epilogue (fused for free by
    # XLA) instead of streaming them into the Pallas kernel.
    a3 = a3 + b3[None, :, None, None]
    a5 = a5 + b5[None, :, None, None]

    # Flatten spatial so the lane dim is HW (256 for H=W=16 -> lane-dense stores).
    a3f = a3.reshape(B, C, HW)
    a5f = a5.reshape(B, C, HW)
    xf = x.reshape(B, C, HW)

    # Batch tile: one grid step on single-TC parts (v5e/v6e) to minimise per-step
    # overhead; exactly two "parallel" steps on v7x so both TensorCores get work.
    n_cores = _tensorcores_per_chip()
    if n_cores >= 2 and B >= 2 and B % 2 == 0:
        bt = B // 2
    else:
        bt = B

    # VMEM headroom: the pipeline double-buffers 4 streamed (bt, C, HW) f32 slabs
    # => ~8*bt*C*HW*4 bytes live.  Keep well under 64 MiB on v7x (128 MiB elsewhere).
    slab_bytes = C * HW * 4
    budget = (48 if n_cores >= 2 else 96) * 1024 * 1024
    while bt > 1 and 8 * bt * slab_bytes > budget:
        bt -= 1
        while B % bt:
            bt -= 1
    # TODO(synk): if even bt=1 exceeds the budget (very large H*W), add an HW tile
    # with a two-pass mean for the channel attention.
    n_steps = B // bt
    vmem_limit = int(min(budget, max(32 * 1024 * 1024, 8 * bt * slab_bytes + (2 << 20))))

    cost = pl.CostEstimate(
        flops=B * C * HW * 7 + B * 4 * C * Cr,
        transcendentals=B * C,
        bytes_accessed=4 * B * C * HW * 4 + 4 * (2 * C * Cr + Cr + C),
    )

    w1t = w1.T                      # (C, Cr): channels on sublanes
    b1_r = b1.reshape(1, 1, Cr)
    b2_r = b2.reshape(1, C, 1)

    out = pl.pallas_call(
        _mscn_tail_kernel,
        out_shape=jax.ShapeDtypeStruct((B, C, HW), x.dtype),
        grid=(n_steps,),
        in_specs=[
            pl.BlockSpec((bt, C, HW), lambda i: (i, 0, 0)),   # conv3 pre-act (+bias)
            pl.BlockSpec((bt, C, HW), lambda i: (i, 0, 0)),   # conv5 pre-act (+bias)
            pl.BlockSpec((bt, C, HW), lambda i: (i, 0, 0)),   # residual x
            pl.BlockSpec((C, Cr), lambda i: (0, 0)),          # W1^T  (C, Cr)
            pl.BlockSpec((1, 1, Cr), lambda i: (0, 0, 0)),    # b1
            pl.BlockSpec((C, Cr), lambda i: (0, 0)),          # W2    (C, Cr)
            pl.BlockSpec((1, C, 1), lambda i: (0, 0, 0)),     # b2
        ],
        out_specs=pl.BlockSpec((bt, C, HW), lambda i: (i, 0, 0)),
        # Overwrite the conv3 buffer (pure intermediate).  Safe only while out_specs
        # and the a3f in_spec keep identical block shapes / index maps.
        input_output_aliases={0: 0},
        compiler_params=pltpu.CompilerParams(
            dimension_semantics=("parallel",),
            vmem_limit_bytes=vmem_limit),
        cost_estimate=cost,
    )(a3f, a5f, xf, w1t, b1_r, w2, b2_r)

    return out.reshape(B, C, H, W)


def mscn_block_ref(x, w3, b3, w5, b5, w1, b1, w2, b2):
    """Pure-JAX reference mirroring the PyTorch MSCN_Block forward."""
    dn = ("NCHW", "OIHW", "NCHW")
    a3 = lax.conv_general_dilated(x, w3, (1, 1), ((1, 1), (1, 1)), dimension_numbers=dn)
    a5 = lax.conv_general_dilated(x, w5, (1, 1), ((2, 2), (2, 2)), dimension_numbers=dn)
    u = (jnp.maximum(a3 + b3[None, :, None, None], 0.0)
         + jnp.maximum(a5 + b5[None, :, None, None], 0.0))
    y = jnp.mean(u, axis=(2, 3), keepdims=True)
    y = jnp.einsum("oc,bcij->boij", w1, y, precision=lax.Precision.HIGHEST) \
        + b1[None, :, None, None]
    y = jnp.maximum(y, 0.0)
    y = jnp.einsum("oc,bcij->boij", w2, y, precision=lax.Precision.HIGHEST) \
        + b2[None, :, None, None]
    s = jax.nn.sigmoid(y)
    return u * s + x


if __name__ == "__main__":
    # MSCN_Block fixes channel=64, reduction=16 -> Cr=4.
    B, C, H, W = 4, 64, 16, 16
    reduction = 16
    Cr = C // reduction

    key = jax.random.PRNGKey(0)
    keys = jax.random.split(key, 9)

    x = jax.random.normal(keys[0], (B, C, H, W), dtype=jnp.float32)
    w3 = jax.random.normal(keys[1], (C, C, 3, 3), dtype=jnp.float32) * 0.05
    b3 = jax.random.normal(keys[2], (C,), dtype=jnp.float32) * 0.05
    w5 = jax.random.normal(keys[3], (C, C, 5, 5), dtype=jnp.float32) * 0.02
    b5 = jax.random.normal(keys[4], (C,), dtype=jnp.float32) * 0.05
    w1 = jax.random.normal(keys[5], (Cr, C), dtype=jnp.float32) * 0.1
    b1 = jax.random.normal(keys[6], (Cr,), dtype=jnp.float32) * 0.1
    w2 = jax.random.normal(keys[7], (C, Cr), dtype=jnp.float32) * 0.1
    b2 = jax.random.normal(keys[8], (C,), dtype=jnp.float32) * 0.1

    out = jax.jit(mscn_block)(x, w3, b3, w5, b5, w1, b1, w2, b2)
    out = jax.block_until_ready(out)

    ref = mscn_block_ref(x, w3, b3, w5, b5, w1, b1, w2, b2)
    assert out.shape == (B, C, H, W)
    assert jnp.allclose(out, ref, atol=1e-3, rtol=1e-3), "mismatch vs reference"

    print("KERNEL_OK")
</pallas_src>

<mosaic_0001>
module attributes {stable_mosaic.version = 11 : i64} {
  func.func @_mscn_tail_kernel(%arg0: i32, %arg1: memref<4x64x256xf32, #tpu.memory_space<vmem>>, %arg2: memref<4x64x256xf32, #tpu.memory_space<vmem>>, %arg3: memref<4x64x256xf32, #tpu.memory_space<vmem>>, %arg4: memref<64x4xf32, #tpu.memory_space<vmem>>, %arg5: memref<1x1x4xf32, #tpu.memory_space<vmem>>, %arg6: memref<64x4xf32, #tpu.memory_space<vmem>>, %arg7: memref<1x64x1xf32, #tpu.memory_space<vmem>>, %arg8: memref<4x64x256xf32, #tpu.memory_space<vmem>>) attributes {dimension_semantics = [#tpu.dimension_semantics<parallel>], iteration_bounds = array<i64: 1>, scalar_prefetch = 0 : i64, scratch_operands = 0 : i64, tpu.core_type = #tpu.core_type<tc>, window_params = [{transform_indices = @transform_0, window_bounds = array<i64: 4, 64, 256>}, {transform_indices = @transform_1, window_bounds = array<i64: 4, 64, 256>}, {transform_indices = @transform_2, window_bounds = array<i64: 4, 64, 256>}, {pipeline_mode = #tpu.pipeline_mode<synchronous>, transform_indices = @transform_3, window_bounds = array<i64: 64, 4>}, {pipeline_mode = #tpu.pipeline_mode<synchronous>, transform_indices = @transform_4, window_bounds = array<i64: 1, 1, 4>}, {pipeline_mode = #tpu.pipeline_mode<synchronous>, transform_indices = @transform_5, window_bounds = array<i64: 64, 4>}, {pipeline_mode = #tpu.pipeline_mode<synchronous>, transform_indices = @transform_6, window_bounds = array<i64: 1, 64, 1>}, {transform_indices = @transform_7, window_bounds = array<i64: 4, 64, 256>}]} {
    %c0 = arith.constant 0 : index
    %c0_0 = arith.constant 0 : index
    %c0_1 = arith.constant 0 : index
    %0 = vector.load %arg1[%c0, %c0_0, %c0_1] : memref<4x64x256xf32, #tpu.memory_space<vmem>>, vector<4x64x256xf32>
    %cst = arith.constant 0.000000e+00 : f32
    %1 = vector.broadcast %cst : f32 to vector<4x64x256xf32>
    %2 = arith.maximumf %0, %1 : vector<4x64x256xf32>
    %c0_2 = arith.constant 0 : index
    %c0_3 = arith.constant 0 : index
    %c0_4 = arith.constant 0 : index
    %3 = vector.load %arg2[%c0_2, %c0_3, %c0_4] : memref<4x64x256xf32, #tpu.memory_space<vmem>>, vector<4x64x256xf32>
    %cst_5 = arith.constant 0.000000e+00 : f32
    %4 = vector.broadcast %cst_5 : f32 to vector<4x64x256xf32>
    %5 = arith.maximumf %3, %4 : vector<4x64x256xf32>
    %6 = arith.addf %2, %5 : vector<4x64x256xf32>
    %cst_6 = arith.constant dense<0.000000e+00> : vector<4x64xf32>
    %7 = vector.multi_reduction <add>, %6, %cst_6 [2] : vector<4x64x256xf32> to vector<4x64xf32>
    %8 = vector.shape_cast %7 : vector<4x64xf32> to vector<4x64x1xf32>
    %cst_7 = arith.constant 2.560000e+02 : f32
    %9 = vector.broadcast %cst_7 : f32 to vector<4x64x1xf32>
    %10 = arith.divf %8, %9 : vector<4x64x1xf32>
    %c0_8 = arith.constant 0 : index
    %c0_9 = arith.constant 0 : index
    %11 = vector.load %arg4[%c0_8, %c0_9] : memref<64x4xf32, #tpu.memory_space<vmem>>, vector<64x4xf32>
    %12 = vector.shape_cast %11 : vector<64x4xf32> to vector<1x64x4xf32>
    %13 = vector.broadcast %10 : vector<4x64x1xf32> to vector<4x64x4xf32>
    %14 = vector.broadcast %12 : vector<1x64x4xf32> to vector<4x64x4xf32>
    %15 = arith.mulf %13, %14 : vector<4x64x4xf32>
    %cst_10 = arith.constant dense<0.000000e+00> : vector<4x4xf32>
    %16 = vector.multi_reduction <add>, %15, %cst_10 [1] : vector<4x64x4xf32> to vector<4x4xf32>
    %17 = vector.shape_cast %16 : vector<4x4xf32> to vector<4x1x4xf32>
    %c0_11 = arith.constant 0 : index
    %c0_12 = arith.constant 0 : index
    %c0_13 = arith.constant 0 : index
    %18 = vector.load %arg5[%c0_11, %c0_12, %c0_13] : memref<1x1x4xf32, #tpu.memory_space<vmem>>, vector<1x1x4xf32>
    %19 = vector.broadcast %18 : vector<1x1x4xf32> to vector<4x1x4xf32>
    %20 = arith.addf %17, %19 : vector<4x1x4xf32>
    %cst_14 = arith.constant 0.000000e+00 : f32
    %21 = vector.broadcast %cst_14 : f32 to vector<4x1x4xf32>
    %22 = arith.maximumf %20, %21 : vector<4x1x4xf32>
    %c0_15 = arith.constant 0 : index
    %c0_16 = arith.constant 0 : index
    %23 = vector.load %arg6[%c0_15, %c0_16] : memref<64x4xf32, #tpu.memory_space<vmem>>, vector<64x4xf32>
    %24 = vector.shape_cast %23 : vector<64x4xf32> to vector<1x64x4xf32>
    %25 = vector.broadcast %24 : vector<1x64x4xf32> to vector<4x64x4xf32>
    %26 = vector.broadcast %22 : vector<4x1x4xf32> to vector<4x64x4xf32>
    %27 = arith.mulf %25, %26 : vector<4x64x4xf32>
    %cst_17 = arith.constant dense<0.000000e+00> : vector<4x64xf32>
    %28 = vector.multi_reduction <add>, %27, %cst_17 [2] : vector<4x64x4xf32> to vector<4x64xf32>
    %29 = vector.shape_cast %28 : vector<4x64xf32> to vector<4x64x1xf32>
    %c0_18 = arith.constant 0 : index
    %c0_19 = arith.constant 0 : index
    %c0_20 = arith.constant 0 : index
    %30 = vector.load %arg7[%c0_18, %c0_19, %c0_20] : memref<1x64x1xf32, #tpu.memory_space<vmem>>, vector<1x64x1xf32>
    %31 = vector.broadcast %30 : vector<1x64x1xf32> to vector<4x64x1xf32>
    %32 = arith.addf %29, %31 : vector<4x64x1xf32>
    %33 = arith.negf %32 : vector<4x64x1xf32>
    %34 = math.exp %33 : vector<4x64x1xf32>
    %cst_21 = arith.constant 1.000000e+00 : f32
    %35 = vector.broadcast %cst_21 : f32 to vector<4x64x1xf32>
    %36 = arith.addf %35, %34 : vector<4x64x1xf32>
    %37 = arith.divf %35, %36 : vector<4x64x1xf32>
    %38 = vector.broadcast %37 : vector<4x64x1xf32> to vector<4x64x256xf32>
    %39 = arith.mulf %6, %38 : vector<4x64x256xf32>
    %c0_22 = arith.constant 0 : index
    %c0_23 = arith.constant 0 : index
    %c0_24 = arith.constant 0 : index
    %40 = vector.load %arg3[%c0_22, %c0_23, %c0_24] : memref<4x64x256xf32, #tpu.memory_space<vmem>>, vector<4x64x256xf32>
    %41 = arith.addf %39, %40 : vector<4x64x256xf32>
    %c0_25 = arith.constant 0 : index
    %c0_26 = arith.constant 0 : index
    %c0_27 = arith.constant 0 : index
    %42 = vector.load %arg8[%c0_25, %c0_26, %c0_27] : memref<4x64x256xf32, #tpu.memory_space<vmem>>, vector<4x64x256xf32>
    tpu.vector_store %arg8[%c0_25, %c0_26, %c0_27], %41 {strides = array<i32>} : memref<4x64x256xf32, #tpu.memory_space<vmem>>, vector<4x64x256xf32>,
    return
  }
  func.func @transform_0(%arg0: i32) -> (i32, i32, i32) {
    %c0_i32 = arith.constant 0 : i32
    %c0_i32_0 = arith.constant 0 : i32
    %c0_i32_1 = arith.constant 0 : i32
    return %arg0, %c0_i32, %c0_i32_0 : i32, i32, i32
  }
  func.func @transform_1(%arg0: i32) -> (i32, i32, i32) {
    %c0_i32 = arith.constant 0 : i32
    %c0_i32_0 = arith.constant 0 : i32
    %c0_i32_1 = arith.constant 0 : i32
    return %arg0, %c0_i32, %c0_i32_0 : i32, i32, i32
  }
  func.func @transform_2(%arg0: i32) -> (i32, i32, i32) {
    %c0_i32 = arith.constant 0 : i32
    %c0_i32_0 = arith.constant 0 : i32
    %c0_i32_1 = arith.constant 0 : i32
    return %arg0, %c0_i32, %c0_i32_0 : i32, i32, i32
  }
  func.func @transform_3(%arg0: i32) -> (i32, i32) {
    %c0_i32 = arith.constant 0 : i32
    %c0_i32_0 = arith.constant 0 : i32
    %c0_i32_1 = arith.constant 0 : i32
    return %c0_i32, %c0_i32_0 : i32, i32
  }
  func.func @transform_4(%arg0: i32) -> (i32, i32, i32) {
    %c0_i32 = arith.constant 0 : i32
    %c0_i32_0 = arith.constant 0 : i32
    %c0_i32_1 = arith.constant 0 : i32
    %c0_i32_2 = arith.constant 0 : i32
    return %c0_i32, %c0_i32_0, %c0_i32_1 : i32, i32, i32
  }
  func.func @transform_5(%arg0: i32) -> (i32, i32) {
    %c0_i32 = arith.constant 0 : i32
    %c0_i32_0 = arith.constant 0 : i32
    %c0_i32_1 = arith.constant 0 : i32
    return %c0_i32, %c0_i32_0 : i32, i32
  }
  func.func @transform_6(%arg0: i32) -> (i32, i32, i32) {
    %c0_i32 = arith.constant 0 : i32
    %c0_i32_0 = arith.constant 0 : i32
    %c0_i32_1 = arith.constant 0 : i32
    %c0_i32_2 = arith.constant 0 : i32
    return %c0_i32, %c0_i32_0, %c0_i32_1 : i32, i32, i32
  }
  func.func @transform_7(%arg0: i32) -> (i32, i32, i32) {
    %c0_i32 = arith.constant 0 : i32
    %c0_i32_0 = arith.constant 0 : i32
    %c0_i32_1 = arith.constant 0 : i32
    return %arg0, %c0_i32, %c0_i32_0 : i32, i32, i32
  }
}

</mosaic_0001>

<llo_original>
// kernel: mscn_block.1
$region0: #{mscn_block.1}
  #allocation0 [shape = 'u32[]', space=smem, size = 0x4, offset = 0x4, fixed_abs, tag = 'smem constant byte address 0x4 - core index']
  #allocation1 [shape = 'u32[72,128]{1,0:T(1,128)}', space=vmem, size = 0x9000, scoped, tag = 'internal scratch']
  %s0 = inlined_call_operand.vmem [shape: f32[4,64,256], index: 0, kind: input, shape index: {}, may-alias: {0,7}]
  %s1 = inlined_call_operand.vmem [shape: f32[4,64,256], index: 1, kind: input, shape index: {}]
  %s2 = inlined_call_operand.vmem [shape: f32[4,64,256], index: 2, kind: input, shape index: {}]
  %s3 = inlined_call_operand.vmem [shape: f32[64,4], index: 3, kind: input, shape index: {}]
  %s4 = inlined_call_operand.vmem [shape: f32[1,1,4], index: 4, kind: input, shape index: {}]
  %s5 = inlined_call_operand.vmem [shape: f32[64,4], index: 5, kind: input, shape index: {}]
  %s6 = inlined_call_operand.vmem [shape: f32[1,64,1], index: 6, kind: input, shape index: {}]
  %s7 = inlined_call_operand.vmem [shape: f32[4,64,256], index: 7, kind: output, shape index: {}, may-alias: {0,7}]
  %s8 = sld [smem:[#allocation0]]
  $region38: #{mscn_block.1} parent=0
    _
  %s10 = ssub.s32 1, %s8
  %s11 = scalar_select 0, %s10, %s8
  // Predicated region
  $region2: #{mscn_block.1} parent=0 // pred_check
    _
  $region3: #{mscn_block.1} parent=0 // pred_check_branch
    %13 = sbr.rel (0) target = $region5
  $region4: #{mscn_block.1} parent=0 // pred_region
    _
  $region5: #{mscn_block.1} parent=0 // pred_fallthru
    _
  // Predicated region
  $region6: #{mscn_block.1} parent=0 // pred_check
    _
  $region7: #{mscn_block.1} parent=0 // pred_check_branch
    %15 = sbr.rel (0) target = $region9
  $region8: #{mscn_block.1} parent=0 // pred_region
    _
  $region9: #{mscn_block.1} parent=0 // pred_fallthru
    _
  // Predicated region
  $region10: #{mscn_block.1} parent=0 // pred_check
    _
  $region11: #{mscn_block.1} parent=0 // pred_check_branch
    %17 = sbr.rel (0) target = $region13
  $region12: #{mscn_block.1} parent=0 // pred_region
    _
  $region13: #{mscn_block.1} parent=0 // pred_fallthru
    _
  // Predicated region
  $region14: #{mscn_block.1} parent=0 // pred_check
    _
  $region15: #{mscn_block.1} parent=0 // pred_check_branch
    %19 = sbr.rel (0) target = $region17
  $region16: #{mscn_block.1} parent=0 // pred_region
    _
  $region17: #{mscn_block.1} parent=0 // pred_fallthru
    _
  // Predicated region
  $region18: #{mscn_block.1} parent=0 // pred_check
    _
  $region19: #{mscn_block.1} parent=0 // pred_check_branch
    %21 = sbr.rel (0) target = $region21
  $region20: #{mscn_block.1} parent=0 // pred_region
    _
  $region21: #{mscn_block.1} parent=0 // pred_fallthru
    _
  // Predicated region
  $region22: #{mscn_block.1} parent=0 // pred_check
    _
  $region23: #{mscn_block.1} parent=0 // pred_check_branch
    %23 = sbr.rel (0) target = $region25
  $region24: #{mscn_block.1} parent=0 // pred_region
    _
  $region25: #{mscn_block.1} parent=0 // pred_fallthru
    _
  // Predicated region
  $region26: #{mscn_block.1} parent=0 // pred_check
    _
  $region27: #{mscn_block.1} parent=0 // pred_check_branch
    %25 = sbr.rel (0) target = $region29
  $region28: #{mscn_block.1} parent=0 // pred_region
    _
  $region29: #{mscn_block.1} parent=0 // pred_fallthru
    _
  %v26 = vld [vmem:[%s0] sm:$0xff]
  %v27 = vld [vmem:[%s0 + $0x8] sm:$0xff]
  %v28 = vld [vmem:[%s0 + $0x10] sm:$0xff]
  %v29 = vld [vmem:[%s0 + $0x18] sm:$0xff]
  %v30 = vld [vmem:[%s0 + $0x20] sm:$0xff]
  %v31 = vld [vmem:[%s0 + $0x28] sm:$0xff]
  %v32 = vld [vmem:[%s0 + $0x30] sm:$0xff]
  %v33 = vld [vmem:[%s0 + $0x38] sm:$0xff]
  %v34 = vld [vmem:[%s0 + $0x40] sm:$0xff]
  %v35 = vld [vmem:[%s0 + $0x48] sm:$0xff]
  %v36 = vld [vmem:[%s0 + $0x50] sm:$0xff]
  %v37 = vld [vmem:[%s0 + $0x58] sm:$0xff]
  %v38 = vld [vmem:[%s0 + $0x60] sm:$0xff]
  %v39 = vld [vmem:[%s0 + $0x68] sm:$0xff]
  %v40 = vld [vmem:[%s0 + $0x70] sm:$0xff]
  %v41 = vld [vmem:[%s0 + $0x78] sm:$0xff]
  %v42 = vld [vmem:[%s0 + $0x80] sm:$0xff]
  %v43 = vld [vmem:[%s0 + $0x88] sm:$0xff]
  %v44 = vld [vmem:[%s0 + $0x90] sm:$0xff]
  %v45 = vld [vmem:[%s0 + $0x98] sm:$0xff]
  %v46 = vld [vmem:[%s0 + $0xa0] sm:$0xff]
  %v47 = vld [vmem:[%s0 + $0xa8] sm:$0xff]
  %v48 = vld [vmem:[%s0 + $0xb0] sm:$0xff]
  %v49 = vld [vmem:[%s0 + $0xb8] sm:$0xff]
  %v50 = vld [vmem:[%s0 + $0xc0] sm:$0xff]
  %v51 = vld [vmem:[%s0 + $0xc8] sm:$0xff]
  %v52 = vld [vmem:[%s0 + $0xd0] sm:$0xff]
  %v53 = vld [vmem:[%s0 + $0xd8] sm:$0xff]
  %v54 = vld [vmem:[%s0 + $0xe0] sm:$0xff]
  %v55 = vld [vmem:[%s0 + $0xe8] sm:$0xff]
  %v56 = vld [vmem:[%s0 + $0xf0] sm:$0xff]
  %v57 = vld [vmem:[%s0 + $0xf8] sm:$0xff]
  %v58 = vld [vmem:[%s0 + $0x100] sm:$0xff]
  %v59 = vld [vmem:[%s0 + $0x108] sm:$0xff]
  %v60 = vld [vmem:[%s0 + $0x110] sm:$0xff]
  %v61 = vld [vmem:[%s0 + $0x118] sm:$0xff]
  %v62 = vld [vmem:[%s0 + $0x120] sm:$0xff]
  %v63 = vld [vmem:[%s0 + $0x128] sm:$0xff]
  %v64 = vld [vmem:[%s0 + $0x130] sm:$0xff]
  %v65 = vld [vmem:[%s0 + $0x138] sm:$0xff]
  %v66 = vld [vmem:[%s0 + $0x140] sm:$0xff]
  %v67 = vld [vmem:[%s0 + $0x148] sm:$0xff]
  %v68 = vld [vmem:[%s0 + $0x150] sm:$0xff]
  %v69 = vld [vmem:[%s0 + $0x158] sm:$0xff]
  %v70 = vld [vmem:[%s0 + $0x160] sm:$0xff]
  %v71 = vld [vmem:[%s0 + $0x168] sm:$0xff]
  %v72 = vld [vmem:[%s0 + $0x170] sm:$0xff]
  %v73 = vld [vmem:[%s0 + $0x178] sm:$0xff]
  %v74 = vld [vmem:[%s0 + $0x180] sm:$0xff]
  %v75 = vld [vmem:[%s0 + $0x188] sm:$0xff]
  %v76 = vld [vmem:[%s0 + $0x190] sm:$0xff]
  %v77 = vld [vmem:[%s0 + $0x198] sm:$0xff]
  %v78 = vld [vmem:[%s0 + $0x1a0] sm:$0xff]
  %v79 = vld [vmem:[%s0 + $0x1a8] sm:$0xff]
  %v80 = vld [vmem:[%s0 + $0x1b0] sm:$0xff]
  %v81 = vld [vmem:[%s0 + $0x1b8] sm:$0xff]
  %v82 = vld [vmem:[%s0 + $0x1c0] sm:$0xff]
  %v83 = vld [vmem:[%s0 + $0x1c8] sm:$0xff]
  %v84 = vld [vmem:[%s0 + $0x1d0] sm:$0xff]
  %v85 = vld [vmem:[%s0 + $0x1d8] sm:$0xff]
  %v86 = vld [vmem:[%s0 + $0x1e0] sm:$0xff]
  %v87 = vld [vmem:[%s0 + $0x1e8] sm:$0xff]
  %v88 = vld [vmem:[%s0 + $0x1f0] sm:$0xff]
  %v89 = vld [vmem:[%s0 + $0x1f8] sm:$0xff]
  %v90 = vmax.f32 %v26, 0.0
  %v91 = vmax.f32 %v27, 0.0
  %v92 = vmax.f32 %v28, 0.0
  %v93 = vmax.f32 %v29, 0.0
  %v94 = vmax.f32 %v30, 0.0
  %v95 = vmax.f32 %v31, 0.0
  %v96 = vmax.f32 %v32, 0.0
  %v97 = vmax.f32 %v33, 0.0
  %v98 = vmax.f32 %v34, 0.0
  %v99 = vmax.f32 %v35, 0.0
  %v100 = vmax.f32 %v36, 0.0
  %v101 = vmax.f32 %v37, 0.0
  %v102 = vmax.f32 %v38, 0.0
  %v103 = vmax.f32 %v39, 0.0
  %v104 = vmax.f32 %v40, 0.0
  %v105 = vmax.f32 %v41, 0.0
  %v106 = vmax.f32 %v42, 0.0
  %v107 = vmax.f32 %v43, 0.0
  %v108 = vmax.f32 %v44, 0.0
  %v109 = vmax.f32 %v45, 0.0
  %v110 = vmax.f32 %v46, 0.0
  %v111 = vmax.f32 %v47, 0.0
  %v112 = vmax.f32 %v48, 0.0
  %v113 = vmax.f32 %v49, 0.0
  %v114 = vmax.f32 %v50, 0.0
  %v115 = vmax.f32 %v51, 0.0
  %v116 = vmax.f32 %v52, 0.0
  %v117 = vmax.f32 %v53, 0.0
  %v118 = vmax.f32 %v54, 0.0
  %v119 = vmax.f32 %v55, 0.0
  %v120 = vmax.f32 %v56, 0.0
  %v121 = vmax.f32 %v57, 0.0
  %v122 = vmax.f32 %v58, 0.0
  %v123 = vmax.f32 %v59, 0.0
  %v124 = vmax.f32 %v60, 0.0
  %v125 = vmax.f32 %v61, 0.0
  %v126 = vmax.f32 %v62, 0.0
  %v127 = vmax.f32 %v63, 0.0
  %v128 = vmax.f32 %v64, 0.0
  %v129 = vmax.f32 %v65, 0.0
  %v130 = vmax.f32 %v66, 0.0
  %v131 = vmax.f32 %v67, 0.0
  %v132 = vmax.f32 %v68, 0.0
  %v133 = vmax.f32 %v69, 0.0
  %v134 = vmax.f32 %v70, 0.0
  %v135 = vmax.f32 %v71, 0.0
  %v136 = vmax.f32 %v72, 0.0
  %v137 = vmax.f32 %v73, 0.0
  %v138 = vmax.f32 %v74, 0.0
  %v139 = vmax.f32 %v75, 0.0
  %v140 = vmax.f32 %v76, 0.0
  %v141 = vmax.f32 %v77, 0.0
  %v142 = vmax.f32 %v78, 0.0
  %v143 = vmax.f32 %v79, 0.0
  %v144 = vmax.f32 %v80, 0.0
  %v145 = vmax.f32 %v81, 0.0
  %v146 = vmax.f32 %v82, 0.0
  %v147 = vmax.f32 %v83, 0.0
  %v148 = vmax.f32 %v84, 0.0
  %v149 = vmax.f32 %v85, 0.0
  %v150 = vmax.f32 %v86, 0.0
  %v151 = vmax.f32 %v87, 0.0
  %v152 = vmax.f32 %v88, 0.0
  %v153 = vmax.f32 %v89, 0.0
  %v154 = vld [vmem:[%s1] sm:$0xff]
  %v155 = vld [vmem:[%s1 + $0x8] sm:$0xff]
  %v156 = vld [vmem:[%s1 + $0x10] sm:$0xff]
  %v157 = vld [vmem:[%s1 + $0x18] sm:$0xff]
  %v158 = vld [vmem:[%s1 + $0x20] sm:$0xff]
  %v159 = vld [vmem:[%s1 + $0x28] sm:$0xff]
  %v160 = vld [vmem:[%s1 + $0x30] sm:$0xff]
  %v161 = vld [vmem:[%s1 + $0x38] sm:$0xff]
  %v162 = vld [vmem:[%s1 + $0x40] sm:$0xff]
  %v163 = vld [vmem:[%s1 + $0x48] sm:$0xff]
  %v164 = vld [vmem:[%s1 + $0x50] sm:$0xff]
  %v165 = vld [vmem:[%s1 + $0x58] sm:$0xff]
  %v166 = vld [vmem:[%s1 + $0x60] sm:$0xff]
  %v167 = vld [vmem:[%s1 + $0x68] sm:$0xff]
  %v168 = vld [vmem:[%s1 + $0x70] sm:$0xff]
  %v169 = vld [vmem:[%s1 + $0x78] sm:$0xff]
  %v170 = vld [vmem:[%s1 + $0x80] sm:$0xff]
  %v171 = vld [vmem:[%s1 + $0x88] sm:$0xff]
  %v172 = vld [vmem:[%s1 + $0x90] sm:$0xff]
  %v173 = vld [vmem:[%s1 + $0x98] sm:$0xff]
  %v174 = vld [vmem:[%s1 + $0xa0] sm:$0xff]
  %v175 = vld [vmem:[%s1 + $0xa8] sm:$0xff]
  %v176 = vld [vmem:[%s1 + $0xb0] sm:$0xff]
  %v177 = vld [vmem:[%s1 + $0xb8] sm:$0xff]
  %v178 = vld [vmem:[%s1 + $0xc0] sm:$0xff]
  %v179 = vld [vmem:[%s1 + $0xc8] sm:$0xff]
  %v180 = vld [vmem:[%s1 + $0xd0] sm:$0xff]
  %v181 = vld [vmem:[%s1 + $0xd8] sm:$0xff]
  %v182 = vld [vmem:[%s1 + $0xe0] sm:$0xff]
  %v183 = vld [vmem:[%s1 + $0xe8] sm:$0xff]
  %v184 = vld [vmem:[%s1 + $0xf0] sm:$0xff]
  %v185 = vld [vmem:[%s1 + $0xf8] sm:$0xff]
  %v186 = vld [vmem:[%s1 + $0x100] sm:$0xff]
  %v187 = vld [vmem:[%s1 + $0x108] sm:$0xff]
  %v188 = vld [vmem:[%s1 + $0x110] sm:$0xff]
  %v189 = vld [vmem:[%s1 + $0x118] sm:$0xff]
  %v190 = vld [vmem:[%s1 + $0x120] sm:$0xff]
  %v191 = vld [vmem:[%s1 + $0x128] sm:$0xff]
  %v192 = vld [vmem:[%s1 + $0x130] sm:$0xff]
  %v193 = vld [vmem:[%s1 + $0x138] sm:$0xff]
  %v194 = vld [vmem:[%s1 + $0x140] sm:$0xff]
  %v195 = vld [vmem:[%s1 + $0x148] sm:$0xff]
  %v196 = vld [vmem:[%s1 + $0x150] sm:$0xff]
  %v197 = vld [vmem:[%s1 + $0x158] sm:$0xff]
  %v198 = vld [vmem:[%s1 + $0x160] sm:$0xff]
  %v199 = vld [vmem:[%s1 + $0x168] sm:$0xff]
  %v200 = vld [vmem:[%s1 + $0x170] sm:$0xff]
  %v201 = vld [vmem:[%s1 + $0x178] sm:$0xff]
  %v202 = vld [vmem:[%s1 + $0x180] sm:$0xff]
  %v203 = vld [vmem:[%s1 + $0x188] sm:$0xff]
  %v204 = vld [vmem:[%s1 + $0x190] sm:$0xff]
  %v205 = vld [vmem:[%s1 + $0x198] sm:$0xff]
  %v206 = vld [vmem:[%s1 + $0x1a0] sm:$0xff]
  %v207 = vld [vmem:[%s1 + $0x1a8] sm:$0xff]
  %v208 = vld [vmem:[%s1 + $0x1b0] sm:$0xff]
  %v209 = vld [vmem:[%s1 + $0x1b8] sm:$0xff]
  %v210 = vld [vmem:[%s1 + $0x1c0] sm:$0xff]
  %v211 = vld [vmem:[%s1 + $0x1c8] sm:$0xff]
  %v212 = vld [vmem:[%s1 + $0x1d0] sm:$0xff]
  %v213 = vld [vmem:[%s1 + $0x1d8] sm:$0xff]
  %v214 = vld [vmem:[%s1 + $0x1e0] sm:$0xff]
  %v215 = vld [vmem:[%s1 + $0x1e8] sm:$0xff]
  %v216 = vld [vmem:[%s1 + $0x1f0] sm:$0xff]
  %v217 = vld [vmem:[%s1 + $0x1f8] sm:$0xff]
  %v218 = vmax.f32 %v154, 0.0
  %v219 = vmax.f32 %v155, 0.0
  %v220 = vmax.f32 %v156, 0.0
  %v221 = vmax.f32 %v157, 0.0
  %v222 = vmax.f32 %v158, 0.0
  %v223 = vmax.f32 %v159, 0.0
  %v224 = vmax.f32 %v160, 0.0
  %v225 = vmax.f32 %v161, 0.0
  %v226 = vmax.f32 %v162, 0.0
  %v227 = vmax.f32 %v163, 0.0
  %v228 = vmax.f32 %v164, 0.0
  %v229 = vmax.f32 %v165, 0.0
  %v230 = vmax.f32 %v166, 0.0
  %v231 = vmax.f32 %v167, 0.0
  %v232 = vmax.f32 %v168, 0.0
  %v233 = vmax.f32 %v169, 0.0
  %v234 = vmax.f32 %v170, 0.0
  %v235 = vmax.f32 %v171, 0.0
  %v236 = vmax.f32 %v172, 0.0
  %v237 = vmax.f32 %v173, 0.0
  %v238 = vmax.f32 %v174, 0.0
  %v239 = vmax.f32 %v175, 0.0
  %v240 = vmax.f32 %v176, 0.0
  %v241 = vmax.f32 %v177, 0.0
  %v242 = vmax.f32 %v178, 0.0
  %v243 = vmax.f32 %v179, 0.0
  %v244 = vmax.f32 %v180, 0.0
  %v245 = vmax.f32 %v181, 0.0
  %v246 = vmax.f32 %v182, 0.0
  %v247 = vmax.f32 %v183, 0.0
  %v248 = vmax.f32 %v184, 0.0
  %v249 = vmax.f32 %v185, 0.0
  %v250 = vmax.f32 %v186, 0.0
  %v251 = vmax.f32 %v187, 0.0
  %v252 = vmax.f32 %v188, 0.0
  %v253 = vmax.f32 %v189, 0.0
  %v254 = vmax.f32 %v190, 0.0
  %v255 = vmax.f32 %v191, 0.0
  %v256 = vmax.f32 %v192, 0.0
  %v257 = vmax.f32 %v193, 0.0
  %v258 = vmax.f32 %v194, 0.0
  %v259 = vmax.f32 %v195, 0.0
  %v260 = vmax.f32 %v196, 0.0
  %v261 = vmax.f32 %v197, 0.0
  %v262 = vmax.f32 %v198, 0.0
  %v263 = vmax.f32 %v199, 0.0
  %v264 = vmax.f32 %v200, 0.0
  %v265 = vmax.f32 %v201, 0.0
  %v266 = vmax.f32 %v202, 0.0
  %v267 = vmax.f32 %v203, 0.0
  %v268 = vmax.f32 %v204, 0.0
  %v269 = vmax.f32 %v205, 0.0
  %v270 = vmax.f32 %v206, 0.0
  %v271 = vmax.f32 %v207, 0.0
  %v272 = vmax.f32 %v208, 0.0
  %v273 = vmax.f32 %v209, 0.0
  %v274 = vmax.f32 %v210, 0.0
  %v275 = vmax.f32 %v211, 0.0
  %v276 = vmax.f32 %v212, 0.0
  %v277 = vmax.f32 %v213, 0.0
  %v278 = vmax.f32 %v214, 0.0
  %v279 = vmax.f32 %v215, 0.0
  %v280 = vmax.f32 %v216, 0.0
  %v281 = vmax.f32 %v217, 0.0
  %v282 = vadd.f32 %v90, %v218
  %v283 = vadd.f32 %v91, %v219
  %v284 = vadd.f32 %v92, %v220
  %v285 = vadd.f32 %v93, %v221
  %v286 = vadd.f32 %v94, %v222
  %v287 = vadd.f32 %v95, %v223
  %v288 = vadd.f32 %v96, %v224
  %v289 = vadd.f32 %v97, %v225
  %v290 = vadd.f32 %v98, %v226
  %v291 = vadd.f32 %v99, %v227
  %v292 = vadd.f32 %v100, %v228
  %v293 = vadd.f32 %v101, %v229
  %v294 = vadd.f32 %v102, %v230
  %v295 = vadd.f32 %v103, %v231
  %v296 = vadd.f32 %v104, %v232
  %v297 = vadd.f32 %v105, %v233
  %v298 = vadd.f32 %v106, %v234
  %v299 = vadd.f32 %v107, %v235
  %v300 = vadd.f32 %v108, %v236
  %v301 = vadd.f32 %v109, %v237
  %v302 = vadd.f32 %v110, %v238
  %v303 = vadd.f32 %v111, %v239
  %v304 = vadd.f32 %v112, %v240
  %v305 = vadd.f32 %v113, %v241
  %v306 = vadd.f32 %v114, %v242
  %v307 = vadd.f32 %v115, %v243
  %v308 = vadd.f32 %v116, %v244
  %v309 = vadd.f32 %v117, %v245
  %v310 = vadd.f32 %v118, %v246
  %v311 = vadd.f32 %v119, %v247
  %v312 = vadd.f32 %v120, %v248
  %v313 = vadd.f32 %v121, %v249
  %v314 = vadd.f32 %v122, %v250
  %v315 = vadd.f32 %v123, %v251
  %v316 = vadd.f32 %v124, %v252
  %v317 = vadd.f32 %v125, %v253
  %v318 = vadd.f32 %v126, %v254
  %v319 = vadd.f32 %v127, %v255
  %v320 = vadd.f32 %v128, %v256
  %v321 = vadd.f32 %v129, %v257
  %v322 = vadd.f32 %v130, %v258
  %v323 = vadd.f32 %v131, %v259
  %v324 = vadd.f32 %v132, %v260
  %v325 = vadd.f32 %v133, %v261
  %v326 = vadd.f32 %v134, %v262
  %v327 = vadd.f32 %v135, %v263
  %v328 = vadd.f32 %v136, %v264
  %v329 = vadd.f32 %v137, %v265
  %v330 = vadd.f32 %v138, %v266
  %v331 = vadd.f32 %v139, %v267
  %v332 = vadd.f32 %v140, %v268
  %v333 = vadd.f32 %v141, %v269
  %v334 = vadd.f32 %v142, %v270
  %v335 = vadd.f32 %v143, %v271
  %v336 = vadd.f32 %v144, %v272
  %v337 = vadd.f32 %v145, %v273
  %v338 = vadd.f32 %v146, %v274
  %v339 = vadd.f32 %v147, %v275
  %v340 = vadd.f32 %v148, %v276
  %v341 = vadd.f32 %v149, %v277
  %v342 = vadd.f32 %v150, %v278
  %v343 = vadd.f32 %v151, %v279
  %v344 = vadd.f32 %v152, %v280
  %v345 = vadd.f32 %v153, %v281
  %v346 = vadd.f32 %v282, %v283
  %347 = vadd.xlane.f32.xlu0 %v346
  %v348 = vpop.xlane.xlu0 %347
  %v349 = vadd.f32 %v284, %v285
  %350 = vadd.xlane.f32.xlu0 %v349
  %v351 = vpop.xlane.xlu0 %350
  %v352 = vadd.f32 %v286, %v287
  %353 = vadd.xlane.f32.xlu0 %v352
  %v354 = vpop.xlane.xlu0 %353
  %v355 = vadd.f32 %v288, %v289
  %356 = vadd.xlane.f32.xlu0 %v355
  %v357 = vpop.xlane.xlu0 %356
  %v358 = vadd.f32 %v290, %v291
  %359 = vadd.xlane.f32.xlu0 %v358
  %v360 = vpop.xlane.xlu0 %359
  %v361 = vadd.f32 %v292, %v293
  %362 = vadd.xlane.f32.xlu0 %v361
  %v363 = vpop.xlane.xlu0 %362
  %v364 = vadd.f32 %v294, %v295
  %365 = vadd.xlane.f32.xlu0 %v364
  %v366 = vpop.xlane.xlu0 %365
  %v367 = vadd.f32 %v296, %v297
  %368 = vadd.xlane.f32.xlu0 %v367
  %v369 = vpop.xlane.xlu0 %368
  %v370 = vadd.f32 %v298, %v299
  %371 = vadd.xlane.f32.xlu0 %v370
  %v372 = vpop.xlane.xlu0 %371
  %v373 = vadd.f32 %v300, %v301
  %374 = vadd.xlane.f32.xlu0 %v373
  %v375 = vpop.xlane.xlu0 %374
  %v376 = vadd.f32 %v302, %v303
  %377 = vadd.xlane.f32.xlu0 %v376
  %v378 = vpop.xlane.xlu0 %377
  %v379 = vadd.f32 %v304, %v305
  %380 = vadd.xlane.f32.xlu0 %v379
  %v381 = vpop.xlane.xlu0 %380
  %v382 = vadd.f32 %v306, %v307
  %383 = vadd.xlane.f32.xlu0 %v382
  %v384 = vpop.xlane.xlu0 %383
  %v385 = vadd.f32 %v308, %v309
  %386 = vadd.xlane.f32.xlu0 %v385
  %v387 = vpop.xlane.xlu0 %386
  %v388 = vadd.f32 %v310, %v311
  %389 = vadd.xlane.f32.xlu0 %v388
  %v390 = vpop.xlane.xlu0 %389
  %v391 = vadd.f32 %v312, %v313
  %392 = vadd.xlane.f32.xlu0 %v391
  %v393 = vpop.xlane.xlu0 %392
  %v394 = vadd.f32 %v314, %v315
  %395 = vadd.xlane.f32.xlu0 %v394
  %v396 = vpop.xlane.xlu0 %395
  %v397 = vadd.f32 %v316, %v317
  %398 = vadd.xlane.f32.xlu0 %v397
  %v399 = vpop.xlane.xlu0 %398
  %v400 = vadd.f32 %v318, %v319
  %401 = vadd.xlane.f32.xlu0 %v400
  %v402 = vpop.xlane.xlu0 %401
  %v403 = vadd.f32 %v320, %v321
  %404 = vadd.xlane.f32.xlu0 %v403
  %v405 = vpop.xlane.xlu0 %404
  %v406 = vadd.f32 %v322, %v323
  %407 = vadd.xlane.f32.xlu0 %v406
  %v408 = vpop.xlane.xlu0 %407
  %v409 = vadd.f32 %v324, %v325
  %410 = vadd.xlane.f32.xlu0 %v409
  %v411 = vpop.xlane.xlu0 %410
  %v412 = vadd.f32 %v326, %v327
  %413 = vadd.xlane.f32.xlu0 %v412
  %v414 = vpop.xlane.xlu0 %413
  %v415 = vadd.f32 %v328, %v329
  %416 = vadd.xlane.f32.xlu0 %v415
  %v417 = vpop.xlane.xlu0 %416
  %v418 = vadd.f32 %v330, %v331
  %419 = vadd.xlane.f32.xlu0 %v418
  %v420 = vpop.xlane.xlu0 %419
  %v421 = vadd.f32 %v332, %v333
  %422 = vadd.xlane.f32.xlu0 %v421
  %v423 = vpop.xlane.xlu0 %422
  %v424 = vadd.f32 %v334, %v335
  %425 = vadd.xlane.f32.xlu0 %v424
  %v426 = vpop.xlane.xlu0 %425
  %v427 = vadd.f32 %v336, %v337
  %428 = vadd.xlane.f32.xlu0 %v427
  %v429 = vpop.xlane.xlu0 %428
  %v430 = vadd.f32 %v338, %v339
  %431 = vadd.xlane.f32.xlu0 %v430
  %v432 = vpop.xlane.xlu0 %431
  %v433 = vadd.f32 %v340, %v341
  %434 = vadd.xlane.f32.xlu0 %v433
  %v435 = vpop.xlane.xlu0 %434
  %v436 = vadd.f32 %v342, %v343
  %437 = vadd.xlane.f32.xlu0 %v436
  %v438 = vpop.xlane.xlu0 %437
  %v439 = vadd.f32 %v344, %v345
  %440 = vadd.xlane.f32.xlu0 %v439
  %v441 = vpop.xlane.xlu0 %440
  %v442 = vrcp.pop 256.0
  %v443 = vmul.f32 256.0, %v442
  %v444 = vsub.f32 1.0, %v443
  %v445 = vmul.f32 %v442, %v444
  %v446 = vadd.f32 %v442, %v445
  %vm447 = vweird.f32 %v442
  %v448 = vsel %vm447, %v442, %v446
  %v449 = vmul.f32 %v348, %v448
  %v450 = vmul.f32 %v351, %v448
  %v451 = vmul.f32 %v354, %v448
  %v452 = vmul.f32 %v357, %v448
  %v453 = vmul.f32 %v360, %v448
  %v454 = vmul.f32 %v363, %v448
  %v455 = vmul.f32 %v366, %v448
  %v456 = vmul.f32 %v369, %v448
  %v457 = vmul.f32 %v372, %v448
  %v458 = vmul.f32 %v375, %v448
  %v459 = vmul.f32 %v378, %v448
  %v460 = vmul.f32 %v381, %v448
  %v461 = vmul.f32 %v384, %v448
  %v462 = vmul.f32 %v387, %v448
  %v463 = vmul.f32 %v390, %v448
  %v464 = vmul.f32 %v393, %v448
  %v465 = vmul.f32 %v396, %v448
  %v466 = vmul.f32 %v399, %v448
  %v467 = vmul.f32 %v402, %v448
  %v468 = vmul.f32 %v405, %v448
  %v469 = vmul.f32 %v408, %v448
  %v470 = vmul.f32 %v411, %v448
  %v471 = vmul.f32 %v414, %v448
  %v472 = vmul.f32 %v417, %v448
  %v473 = vmul.f32 %v420, %v448
  %v474 = vmul.f32 %v423, %v448
  %v475 = vmul.f32 %v426, %v448
  %v476 = vmul.f32 %v429, %v448
  %v477 = vmul.f32 %v432, %v448
  %v478 = vmul.f32 %v435, %v448
  %v479 = vmul.f32 %v438, %v448
  %v480 = vmul.f32 %v441, %v448
  %v481 = vld [vmem:[%s3] sm:$0xff]
  %v482 = vld [vmem:[%s3 + $0x8] sm:$0xff]
  %v483 = vld [vmem:[%s3 + $0x10] sm:$0xff]
  %v484 = vld [vmem:[%s3 + $0x18] sm:$0xff]
  %v485 = vld [vmem:[%s3 + $0x20] sm:$0xff]
  %v486 = vld [vmem:[%s3 + $0x28] sm:$0xff]
  %v487 = vld [vmem:[%s3 + $0x30] sm:$0xff]
  %v488 = vld [vmem:[%s3 + $0x38] sm:$0xff]
  %v489 = vmul.f32 %v449, %v481
  %v490 = vmul.f32 %v450, %v482
  %v491 = vmul.f32 %v451, %v483
  %v492 = vmul.f32 %v452, %v484
  %v493 = vmul.f32 %v453, %v485
  %v494 = vmul.f32 %v454, %v486
  %v495 = vmul.f32 %v455, %v487
  %v496 = vmul.f32 %v456, %v488
  %v497 = vmul.f32 %v457, %v481
  %v498 = vmul.f32 %v458, %v482
  %v499 = vmul.f32 %v459, %v483
  %v500 = vmul.f32 %v460, %v484
  %v501 = vmul.f32 %v461, %v485
  %v502 = vmul.f32 %v462, %v486
  %v503 = vmul.f32 %v463, %v487
  %v504 = vmul.f32 %v464, %v488
  %v505 = vmul.f32 %v465, %v481
  %v506 = vmul.f32 %v466, %v482
  %v507 = vmul.f32 %v467, %v483
  %v508 = vmul.f32 %v468, %v484
  %v509 = vmul.f32 %v469, %v485
  %v510 = vmul.f32 %v470, %v486
  %v511 = vmul.f32 %v471, %v487
  %v512 = vmul.f32 %v472, %v488
  %v513 = vmul.f32 %v473, %v481
  %v514 = vmul.f32 %v474, %v482
  %v515 = vmul.f32 %v475, %v483
  %v516 = vmul.f32 %v476, %v484
  %v517 = vmul.f32 %v477, %v485
  %v518 = vmul.f32 %v478, %v486
  %v519 = vmul.f32 %v479, %v487
  %v520 = vmul.f32 %v480, %v488
  %vm521 = vcmask 31744
  %v522 = vsel %vm521, %v489, 0.0
  %v523 = vsel %vm521, %v490, 0.0
  %v524 = vadd.f32 %v522, %v523
  %v525 = vsel %vm521, %v491, 0.0
  %v526 = vadd.f32 %v524, %v525
  %v527 = vsel %vm521, %v492, 0.0
  %v528 = vadd.f32 %v526, %v527
  %v529 = vsel %vm521, %v493, 0.0
  %v530 = vadd.f32 %v528, %v529
  %v531 = vsel %vm521, %v494, 0.0
  %v532 = vadd.f32 %v530, %v531
  %v533 = vsel %vm521, %v495, 0.0
  %v534 = vadd.f32 %v532, %v533
  %v535 = vsel %vm521, %v496, 0.0
  %v536 = vadd.f32 %v534, %v535
  %v537 = vrot.slane %v536, 4
  %v538 = vadd.f32 %v536, %v537
  %v539 = vrot.slane %v538, 2
  %v540 = vadd.f32 %v538, %v539
  %v541 = vrot.slane %v540, 1
  %v542 = vadd.f32 %v540, %v541
  %v543 = vsel %vm521, %v497, 0.0
  %v544 = vsel %vm521, %v498, 0.0
  %v545 = vadd.f32 %v543, %v544
  %v546 = vsel %vm521, %v499, 0.0
  %v547 = vadd.f32 %v545, %v546
  %v548 = vsel %vm521, %v500, 0.0
  %v549 = vadd.f32 %v547, %v548
  %v550 = vsel %vm521, %v501, 0.0
  %v551 = vadd.f32 %v549, %v550
  %v552 = vsel %vm521, %v502, 0.0
  %v553 = vadd.f32 %v551, %v552
  %v554 = vsel %vm521, %v503, 0.0
  %v555 = vadd.f32 %v553, %v554
  %v556 = vsel %vm521, %v504, 0.0
  %v557 = vadd.f32 %v555, %v556
  %v558 = vrot.slane %v557, 4
  %v559 = vadd.f32 %v557, %v558
  %v560 = vrot.slane %v559, 2
  %v561 = vadd.f32 %v559, %v560
  %v562 = vrot.slane %v561, 1
  %v563 = vadd.f32 %v561, %v562
  %v564 = vsel %vm521, %v505, 0.0
  %v565 = vsel %vm521, %v506, 0.0
  %v566 = vadd.f32 %v564, %v565
  %v567 = vsel %vm521, %v507, 0.0
  %v568 = vadd.f32 %v566, %v567
  %v569 = vsel %vm521, %v508, 0.0
  %v570 = vadd.f32 %v568, %v569
  %v571 = vsel %vm521, %v509, 0.0
  %v572 = vadd.f32 %v570, %v571
  %v573 = vsel %vm521, %v510, 0.0
  %v574 = vadd.f32 %v572, %v573
  %v575 = vsel %vm521, %v511, 0.0
  %v576 = vadd.f32 %v574, %v575
  %v577 = vsel %vm521, %v512, 0.0
  %v578 = vadd.f32 %v576, %v577
  %v579 = vrot.slane %v578, 4
  %v580 = vadd.f32 %v578, %v579
  %v581 = vrot.slane %v580, 2
  %v582 = vadd.f32 %v580, %v581
  %v583 = vrot.slane %v582, 1
  %v584 = vadd.f32 %v582, %v583
  %v585 = vsel %vm521, %v513, 0.0
  %v586 = vsel %vm521, %v514, 0.0
  %v587 = vadd.f32 %v585, %v586
  %v588 = vsel %vm521, %v515, 0.0
  %v589 = vadd.f32 %v587, %v588
  %v590 = vsel %vm521, %v516, 0.0
  %v591 = vadd.f32 %v589, %v590
  %v592 = vsel %vm521, %v517, 0.0
  %v593 = vadd.f32 %v591, %v592
  %v594 = vsel %vm521, %v518, 0.0
  %v595 = vadd.f32 %v593, %v594
  %v596 = vsel %vm521, %v519, 0.0
  %v597 = vadd.f32 %v595, %v596
  %v598 = vsel %vm521, %v520, 0.0
  %v599 = vadd.f32 %v597, %v598
  %v600 = vrot.slane %v599, 4
  %v601 = vadd.f32 %v599, %v600
  %v602 = vrot.slane %v601, 2
  %v603 = vadd.f32 %v601, %v602
  %v604 = vrot.slane %v603, 1
  %v605 = vadd.f32 %v603, %v604
  %v606 = vld [vmem:[%s4] sm:$0x1]
  %v607 = vadd.f32 %v542, %v606
  %v608 = vadd.f32 %v563, %v606
  %v609 = vadd.f32 %v584, %v606
  %v610 = vadd.f32 %v605, %v606
  %v611 = vmax.f32 %v607, 0.0
  %v612 = vmax.f32 %v608, 0.0
  %v613 = vmax.f32 %v609, 0.0
  %v614 = vmax.f32 %v610, 0.0
  %v615 = vld [vmem:[%s5] sm:$0xff]
  %v616 = vld [vmem:[%s5 + $0x8] sm:$0xff]
  %v617 = vld [vmem:[%s5 + $0x10] sm:$0xff]
  %v618 = vld [vmem:[%s5 + $0x18] sm:$0xff]
  %v619 = vld [vmem:[%s5 + $0x20] sm:$0xff]
  %v620 = vld [vmem:[%s5 + $0x28] sm:$0xff]
  %v621 = vld [vmem:[%s5 + $0x30] sm:$0xff]
  %v622 = vld [vmem:[%s5 + $0x38] sm:$0xff]
  %v623 = vperm.slane %v611, 0
  %v624 = vperm.slane %v612, 0
  %v625 = vperm.slane %v613, 0
  %v626 = vperm.slane %v614, 0
  %v627 = vmul.f32 %v615, %v623
  %v628 = vmul.f32 %v616, %v623
  %v629 = vmul.f32 %v617, %v623
  %v630 = vmul.f32 %v618, %v623
  %v631 = vmul.f32 %v619, %v623
  %v632 = vmul.f32 %v620, %v623
  %v633 = vmul.f32 %v621, %v623
  %v634 = vmul.f32 %v622, %v623
  %v635 = vmul.f32 %v615, %v624
  %v636 = vmul.f32 %v616, %v624
  %v637 = vmul.f32 %v617, %v624
  %v638 = vmul.f32 %v618, %v624
  %v639 = vmul.f32 %v619, %v624
  %v640 = vmul.f32 %v620, %v624
  %v641 = vmul.f32 %v621, %v624
  %v642 = vmul.f32 %v622, %v624
  %v643 = vmul.f32 %v615, %v625
  %v644 = vmul.f32 %v616, %v625
  %v645 = vmul.f32 %v617, %v625
  %v646 = vmul.f32 %v618, %v625
  %v647 = vmul.f32 %v619, %v625
  %v648 = vmul.f32 %v620, %v625
  %v649 = vmul.f32 %v621, %v625
  %v650 = vmul.f32 %v622, %v625
  %v651 = vmul.f32 %v615, %v626
  %v652 = vmul.f32 %v616, %v626
  %v653 = vmul.f32 %v617, %v626
  %v654 = vmul.f32 %v618, %v626
  %v655 = vmul.f32 %v619, %v626
  %v656 = vmul.f32 %v620, %v626
  %v657 = vmul.f32 %v621, %v626
  %v658 = vmul.f32 %v622, %v626
  %v659 = vsel %vm521, %v627, 0.0
  %660 = vadd.xlane.f32.xlu0 %v659
  %v661 = vpop.xlane.xlu0 %660
  %v662 = vsel %vm521, %v628, 0.0
  %663 = vadd.xlane.f32.xlu0 %v662
  %v664 = vpop.xlane.xlu0 %663
  %v665 = vsel %vm521, %v629, 0.0
  %666 = vadd.xlane.f32.xlu0 %v665
  %v667 = vpop.xlane.xlu0 %666
  %v668 = vsel %vm521, %v630, 0.0
  %669 = vadd.xlane.f32.xlu0 %v668
  %v670 = vpop.xlane.xlu0 %669
  %v671 = vsel %vm521, %v631, 0.0
  %672 = vadd.xlane.f32.xlu0 %v671
  %v673 = vpop.xlane.xlu0 %672
  %v674 = vsel %vm521, %v632, 0.0
  %675 = vadd.xlane.f32.xlu0 %v674
  %v676 = vpop.xlane.xlu0 %675
  %v677 = vsel %vm521, %v633, 0.0
  %678 = vadd.xlane.f32.xlu0 %v677
  %v679 = vpop.xlane.xlu0 %678
  %v680 = vsel %vm521, %v634, 0.0
  %681 = vadd.xlane.f32.xlu0 %v680
  %v682 = vpop.xlane.xlu0 %681
  %v683 = vsel %vm521, %v635, 0.0
  %684 = vadd.xlane.f32.xlu0 %v683
  %v685 = vpop.xlane.xlu0 %684
  %v686 = vsel %vm521, %v636, 0.0
  %687 = vadd.xlane.f32.xlu0 %v686
  %v688 = vpop.xlane.xlu0 %687
  %v689 = vsel %vm521, %v637, 0.0
  %690 = vadd.xlane.f32.xlu0 %v689
  %v691 = vpop.xlane.xlu0 %690
  %v692 = vsel %vm521, %v638, 0.0
  %693 = vadd.xlane.f32.xlu0 %v692
  %v694 = vpop.xlane.xlu0 %693
  %v695 = vsel %vm521, %v639, 0.0
  %696 = vadd.xlane.f32.xlu0 %v695
  %v697 = vpop.xlane.xlu0 %696
  %v698 = vsel %vm521, %v640, 0.0
  %699 = vadd.xlane.f32.xlu0 %v698
  %v700 = vpop.xlane.xlu0 %699
  %v701 = vsel %vm521, %v641, 0.0
  %702 = vadd.xlane.f32.xlu0 %v701
  %v703 = vpop.xlane.xlu0 %702
  %v704 = vsel %vm521, %v642, 0.0
  %705 = vadd.xlane.f32.xlu0 %v704
  %v706 = vpop.xlane.xlu0 %705
  %v707 = vsel %vm521, %v643, 0.0
  %708 = vadd.xlane.f32.xlu0 %v707
  %v709 = vpop.xlane.xlu0 %708
  %v710 = vsel %vm521, %v644, 0.0
  %711 = vadd.xlane.f32.xlu0 %v710
  %v712 = vpop.xlane.xlu0 %711
  %v713 = vsel %vm521, %v645, 0.0
  %714 = vadd.xlane.f32.xlu0 %v713
  %v715 = vpop.xlane.xlu0 %714
  %v716 = vsel %vm521, %v646, 0.0
  %717 = vadd.xlane.f32.xlu0 %v716
  %v718 = vpop.xlane.xlu0 %717
  %v719 = vsel %vm521, %v647, 0.0
  %720 = vadd.xlane.f32.xlu0 %v719
  %v721 = vpop.xlane.xlu0 %720
  %v722 = vsel %vm521, %v648, 0.0
  %723 = vadd.xlane.f32.xlu0 %v722
  %v724 = vpop.xlane.xlu0 %723
  %v725 = vsel %vm521, %v649, 0.0
  %726 = vadd.xlane.f32.xlu0 %v725
  %v727 = vpop.xlane.xlu0 %726
  %v728 = vsel %vm521, %v650, 0.0
  %729 = vadd.xlane.f32.xlu0 %v728
  %v730 = vpop.xlane.xlu0 %729
  %v731 = vsel %vm521, %v651, 0.0
  %732 = vadd.xlane.f32.xlu0 %v731
  %v733 = vpop.xlane.xlu0 %732
  %v734 = vsel %vm521, %v652, 0.0
  %735 = vadd.xlane.f32.xlu0 %v734
  %v736 = vpop.xlane.xlu0 %735
  %v737 = vsel %vm521, %v653, 0.0
  %738 = vadd.xlane.f32.xlu0 %v737
  %v739 = vpop.xlane.xlu0 %738
  %v740 = vsel %vm521, %v654, 0.0
  %741 = vadd.xlane.f32.xlu0 %v740
  %v742 = vpop.xlane.xlu0 %741
  %v743 = vsel %vm521, %v655, 0.0
  %744 = vadd.xlane.f32.xlu0 %v743
  %v745 = vpop.xlane.xlu0 %744
  %v746 = vsel %vm521, %v656, 0.0
  %747 = vadd.xlane.f32.xlu0 %v746
  %v748 = vpop.xlane.xlu0 %747
  %v749 = vsel %vm521, %v657, 0.0
  %750 = vadd.xlane.f32.xlu0 %v749
  %v751 = vpop.xlane.xlu0 %750
  %v752 = vsel %vm521, %v658, 0.0
  %753 = vadd.xlane.f32.xlu0 %v752
  %v754 = vpop.xlane.xlu0 %753
  %v755 = vld [vmem:[%s6] sm:$0xff]
  %v756 = vld [vmem:[%s6 + $0x8] sm:$0xff]
  %v757 = vld [vmem:[%s6 + $0x10] sm:$0xff]
  %v758 = vld [vmem:[%s6 + $0x18] sm:$0xff]
  %v759 = vld [vmem:[%s6 + $0x20] sm:$0xff]
  %v760 = vld [vmem:[%s6 + $0x28] sm:$0xff]
  %v761 = vld [vmem:[%s6 + $0x30] sm:$0xff]
  %v762 = vld [vmem:[%s6 + $0x38] sm:$0xff]
  %v763 = vadd.f32 %v661, %v755
  %v764 = vadd.f32 %v664, %v756
  %v765 = vadd.f32 %v667, %v757
  %v766 = vadd.f32 %v670, %v758
  %v767 = vadd.f32 %v673, %v759
  %v768 = vadd.f32 %v676, %v760
  %v769 = vadd.f32 %v679, %v761
  %v770 = vadd.f32 %v682, %v762
  %v771 = vadd.f32 %v685, %v755
  %v772 = vadd.f32 %v688, %v756
  %v773 = vadd.f32 %v691, %v757
  %v774 = vadd.f32 %v694, %v758
  %v775 = vadd.f32 %v697, %v759
  %v776 = vadd.f32 %v700, %v760
  %v777 = vadd.f32 %v703, %v761
  %v778 = vadd.f32 %v706, %v762
  %v779 = vadd.f32 %v709, %v755
  %v780 = vadd.f32 %v712, %v756
  %v781 = vadd.f32 %v715, %v757
  %v782 = vadd.f32 %v718, %v758
  %v783 = vadd.f32 %v721, %v759
  %v784 = vadd.f32 %v724, %v760
  %v785 = vadd.f32 %v727, %v761
  %v786 = vadd.f32 %v730, %v762
  %v787 = vadd.f32 %v733, %v755
  %v788 = vadd.f32 %v736, %v756
  %v789 = vadd.f32 %v739, %v757
  %v790 = vadd.f32 %v742, %v758
  %v791 = vadd.f32 %v745, %v759
  %v792 = vadd.f32 %v748, %v760
  %v793 = vadd.f32 %v751, %v761
  %v794 = vadd.f32 %v754, %v762
  %v795 = vxor.u32 %v763, 2147483648
  %v796 = vxor.u32 %v764, 2147483648
  %v797 = vxor.u32 %v765, 2147483648
  %v798 = vxor.u32 %v766, 2147483648
  %v799 = vxor.u32 %v767, 2147483648
  %v800 = vxor.u32 %v768, 2147483648
  %v801 = vxor.u32 %v769, 2147483648
  %v802 = vxor.u32 %v770, 2147483648
  %v803 = vxor.u32 %v771, 2147483648
  %v804 = vxor.u32 %v772, 2147483648
  %v805 = vxor.u32 %v773, 2147483648
  %v806 = vxor.u32 %v774, 2147483648
  %v807 = vxor.u32 %v775, 2147483648
  %v808 = vxor.u32 %v776, 2147483648
  %v809 = vxor.u32 %v777, 2147483648
  %v810 = vxor.u32 %v778, 2147483648
  %v811 = vxor.u32 %v779, 2147483648
  %v812 = vxor.u32 %v780, 2147483648
  %v813 = vxor.u32 %v781, 2147483648
  %v814 = vxor.u32 %v782, 2147483648
  %v815 = vxor.u32 %v783, 2147483648
  %v816 = vxor.u32 %v784, 2147483648
  %v817 = vxor.u32 %v785, 2147483648
  %v818 = vxor.u32 %v786, 2147483648
  %v819 = vxor.u32 %v787, 2147483648
  %v820 = vxor.u32 %v788, 2147483648
  %v821 = vxor.u32 %v789, 2147483648
  %v822 = vxor.u32 %v790, 2147483648
  %v823 = vxor.u32 %v791, 2147483648
  %v824 = vxor.u32 %v792, 2147483648
  %v825 = vxor.u32 %v793, 2147483648
  %v826 = vxor.u32 %v794, 2147483648
  %v827 = vmul.f32 %v795, 1.442695
  %v828 = vpow.pop %v827
  %v829 = vmul.f32 %v796, 1.442695
  %v830 = vpow.pop %v829
  %v831 = vmul.f32 %v797, 1.442695
  %v832 = vpow.pop %v831
  %v833 = vmul.f32 %v798, 1.442695
  %v834 = vpow.pop %v833
  %v835 = vmul.f32 %v799, 1.442695
  %v836 = vpow.pop %v835
  %v837 = vmul.f32 %v800, 1.442695
  %v838 = vpow.pop %v837
  %v839 = vmul.f32 %v801, 1.442695
  %v840 = vpow.pop %v839
  %v841 = vmul.f32 %v802, 1.442695
  %v842 = vpow.pop %v841
  %v843 = vmul.f32 %v803, 1.442695
  %v844 = vpow.pop %v843
  %v845 = vmul.f32 %v804, 1.442695
  %v846 = vpow.pop %v845
  %v847 = vmul.f32 %v805, 1.442695
  %v848 = vpow.pop %v847
  %v849 = vmul.f32 %v806, 1.442695
  %v850 = vpow.pop %v849
  %v851 = vmul.f32 %v807, 1.442695
  %v852 = vpow.pop %v851
  %v853 = vmul.f32 %v808, 1.442695
  %v854 = vpow.pop %v853
  %v855 = vmul.f32 %v809, 1.442695
  %v856 = vpow.pop %v855
  %v857 = vmul.f32 %v810, 1.442695
  %v858 = vpow.pop %v857
  %v859 = vmul.f32 %v811, 1.442695
  %v860 = vpow.pop %v859
  %v861 = vmul.f32 %v812, 1.442695
  %v862 = vpow.pop %v861
  %v863 = vmul.f32 %v813, 1.442695
  %v864 = vpow.pop %v863
  %v865 = vmul.f32 %v814, 1.442695
  %v866 = vpow.pop %v865
  %v867 = vmul.f32 %v815, 1.442695
  %v868 = vpow.pop %v867
  %v869 = vmul.f32 %v816, 1.442695
  %v870 = vpow.pop %v869
  %v871 = vmul.f32 %v817, 1.442695
  %v872 = vpow.pop %v871
  %v873 = vmul.f32 %v818, 1.442695
  %v874 = vpow.pop %v873
  %v875 = vmul.f32 %v819, 1.442695
  %v876 = vpow.pop %v875
  %v877 = vmul.f32 %v820, 1.442695
  %v878 = vpow.pop %v877
  %v879 = vmul.f32 %v821, 1.442695
  %v880 = vpow.pop %v879
  %v881 = vmul.f32 %v822, 1.442695
  %v882 = vpow.pop %v881
  %v883 = vmul.f32 %v823, 1.442695
  %v884 = vpow.pop %v883
  %v885 = vmul.f32 %v824, 1.442695
  %v886 = vpow.pop %v885
  %v887 = vmul.f32 %v825, 1.442695
  %v888 = vpow.pop %v887
  %v889 = vmul.f32 %v826, 1.442695
  %v890 = vpow.pop %v889
  %v891 = vadd.f32 %v828, 1.0
  %v892 = vadd.f32 %v830, 1.0
  %v893 = vadd.f32 %v832, 1.0
  %v894 = vadd.f32 %v834, 1.0
  %v895 = vadd.f32 %v836, 1.0
  %v896 = vadd.f32 %v838, 1.0
  %v897 = vadd.f32 %v840, 1.0
  %v898 = vadd.f32 %v842, 1.0
  %v899 = vadd.f32 %v844, 1.0
  %v900 = vadd.f32 %v846, 1.0
  %v901 = vadd.f32 %v848, 1.0
  %v902 = vadd.f32 %v850, 1.0
  %v903 = vadd.f32 %v852, 1.0
  %v904 = vadd.f32 %v854, 1.0
  %v905 = vadd.f32 %v856, 1.0
  %v906 = vadd.f32 %v858, 1.0
  %v907 = vadd.f32 %v860, 1.0
  %v908 = vadd.f32 %v862, 1.0
  %v909 = vadd.f32 %v864, 1.0
  %v910 = vadd.f32 %v866, 1.0
  %v911 = vadd.f32 %v868, 1.0
  %v912 = vadd.f32 %v870, 1.0
  %v913 = vadd.f32 %v872, 1.0
  %v914 = vadd.f32 %v874, 1.0
  %v915 = vadd.f32 %v876, 1.0
  %v916 = vadd.f32 %v878, 1.0
  %v917 = vadd.f32 %v880, 1.0
  %v918 = vadd.f32 %v882, 1.0
  %v919 = vadd.f32 %v884, 1.0
  %v920 = vadd.f32 %v886, 1.0
  %v921 = vadd.f32 %v888, 1.0
  %v922 = vadd.f32 %v890, 1.0
  %v923 = vrcp.pop %v891
  %v924 = vmul.f32 %v891, %v923
  %v925 = vsub.f32 1.0, %v924
  %v926 = vmul.f32 %v923, %v925
  %v927 = vadd.f32 %v923, %v926
  %vm928 = vweird.f32 %v891
  %vm929 = vweird.f32 %v923
  %vm930 = vmor %vm928, %vm929
  %v931 = vsel %vm930, %v923, %v927
  %v932 = vand.u32 2147483647, %v891
  %vm933 = vcmp.eq.f32.partialorder %v932, 8.507059e+37
  %v934 = vand.u32 %v891, 2147483648
  %v935 = vor.u32 1.1754944e-38, %v934
  %v936 = vsel %vm933, %v935, %v931
  %v937 = vmul.f32 1.0, %v936
  %v938 = vrcp.pop %v892
  %v939 = vmul.f32 %v892, %v938
  %v940 = vsub.f32 1.0, %v939
  %v941 = vmul.f32 %v938, %v940
  %v942 = vadd.f32 %v938, %v941
  %vm943 = vweird.f32 %v892
  %vm944 = vweird.f32 %v938
  %vm945 = vmor %vm943, %vm944
  %v946 = vsel %vm945, %v938, %v942
  %v947 = vand.u32 2147483647, %v892
  %vm948 = vcmp.eq.f32.partialorder %v947, 8.507059e+37
  %v949 = vand.u32 %v892, 2147483648
  %v950 = vor.u32 1.1754944e-38, %v949
  %v951 = vsel %vm948, %v950, %v946
  %v952 = vmul.f32 1.0, %v951
  %v953 = vrcp.pop %v893
  %v954 = vmul.f32 %v893, %v953
  %v955 = vsub.f32 1.0, %v954
  %v956 = vmul.f32 %v953, %v955
  %v957 = vadd.f32 %v953, %v956
  %vm958 = vweird.f32 %v893
  %vm959 = vweird.f32 %v953
  %vm960 = vmor %vm958, %vm959
  %v961 = vsel %vm960, %v953, %v957
  %v962 = vand.u32 2147483647, %v893
  %vm963 = vcmp.eq.f32.partialorder %v962, 8.507059e+37
  %v964 = vand.u32 %v893, 2147483648
  %v965 = vor.u32 1.1754944e-38, %v964
  %v966 = vsel %vm963, %v965, %v961
  %v967 = vmul.f32 1.0, %v966
  %v968 = vrcp.pop %v894
  %v969 = vmul.f32 %v894, %v968
  %v970 = vsub.f32 1.0, %v969
  %v971 = vmul.f32 %v968, %v970
  %v972 = vadd.f32 %v968, %v971
  %vm973 = vweird.f32 %v894
  %vm974 = vweird.f32 %v968
  %vm975 = vmor %vm973, %vm974
  %v976 = vsel %vm975, %v968, %v972
  %v977 = vand.u32 2147483647, %v894
  %vm978 = vcmp.eq.f32.partialorder %v977, 8.507059e+37
  %v979 = vand.u32 %v894, 2147483648
  %v980 = vor.u32 1.1754944e-38, %v979
  %v981 = vsel %vm978, %v980, %v976
  %v982 = vmul.f32 1.0, %v981
  %v983 = vrcp.pop %v895
  %v984 = vmul.f32 %v895, %v983
  %v985 = vsub.f32 1.0, %v984
  %v986 = vmul.f32 %v983, %v985
  %v987 = vadd.f32 %v983, %v986
  %vm988 = vweird.f32 %v895
  %vm989 = vweird.f32 %v983
  %vm990 = vmor %vm988, %vm989
  %v991 = vsel %vm990, %v983, %v987
  %v992 = vand.u32 2147483647, %v895
  %vm993 = vcmp.eq.f32.partialorder %v992, 8.507059e+37
  %v994 = vand.u32 %v895, 2147483648
  %v995 = vor.u32 1.1754944e-38, %v994
  %v996 = vsel %vm993, %v995, %v991
  %v997 = vmul.f32 1.0, %v996
  %v998 = vrcp.pop %v896
  %v999 = vmul.f32 %v896, %v998
  %v1000 = vsub.f32 1.0, %v999
  %v1001 = vmul.f32 %v998, %v1000
  %v1002 = vadd.f32 %v998, %v1001
  %vm1003 = vweird.f32 %v896
  %vm1004 = vweird.f32 %v998
  %vm1005 = vmor %vm1003, %vm1004
  %v1006 = vsel %vm1005, %v998, %v1002
  %v1007 = vand.u32 2147483647, %v896
  %vm1008 = vcmp.eq.f32.partialorder %v1007, 8.507059e+37
  %v1009 = vand.u32 %v896, 2147483648
  %v1010 = vor.u32 1.1754944e-38, %v1009
  %v1011 = vsel %vm1008, %v1010, %v1006
  %v1012 = vmul.f32 1.0, %v1011
  %v1013 = vrcp.pop %v897
  %v1014 = vmul.f32 %v897, %v1013
  %v1015 = vsub.f32 1.0, %v1014
  %v1016 = vmul.f32 %v1013, %v1015
  %v1017 = vadd.f32 %v1013, %v1016
  %vm1018 = vweird.f32 %v897
  %vm1019 = vweird.f32 %v1013
  %vm1020 = vmor %vm1018, %vm1019
  %v1021 = vsel %vm1020, %v1013, %v1017
  %v1022 = vand.u32 2147483647, %v897
  %vm1023 = vcmp.eq.f32.partialorder %v1022, 8.507059e+37
  %v1024 = vand.u32 %v897, 2147483648
  %v1025 = vor.u32 1.1754944e-38, %v1024
  %v1026 = vsel %vm1023, %v1025, %v1021
  %v1027 = vmul.f32 1.0, %v1026
  %v1028 = vrcp.pop %v898
  %v1029 = vmul.f32 %v898, %v1028
  %v1030 = vsub.f32 1.0, %v1029
  %v1031 = vmul.f32 %v1028, %v1030
  %v1032 = vadd.f32 %v1028, %v1031
  %vm1033 = vweird.f32 %v898
  %vm1034 = vweird.f32 %v1028
  %vm1035 = vmor %vm1033, %vm1034
  %v1036 = vsel %vm1035, %v1028, %v1032
  %v1037 = vand.u32 2147483647, %v898
  %vm1038 = vcmp.eq.f32.partialorder %v1037, 8.507059e+37
  %v1039 = vand.u32 %v898, 2147483648
  %v1040 = vor.u32 1.1754944e-38, %v1039
  %v1041 = vsel %vm1038, %v1040, %v1036
  %v1042 = vmul.f32 1.0, %v1041
  %v1043 = vrcp.pop %v899
  %v1044 = vmul.f32 %v899, %v1043
  %v1045 = vsub.f32 1.0, %v1044
  %v1046 = vmul.f32 %v1043, %v1045
  %v1047 = vadd.f32 %v1043, %v1046
  %vm1048 = vweird.f32 %v899
  %vm1049 = vweird.f32 %v1043
  %vm1050 = vmor %vm1048, %vm1049
  %v1051 = vsel %vm1050, %v1043, %v1047
  %v1052 = vand.u32 2147483647, %v899
  %vm1053 = vcmp.eq.f32.partialorder %v1052, 8.507059e+37
  %v1054 = vand.u32 %v899, 2147483648
  %v1055 = vor.u32 1.1754944e-38, %v1054
  %v1056 = vsel %vm1053, %v1055, %v1051
  %v1057 = vmul.f32 1.0, %v1056
  %v1058 = vrcp.pop %v900
  %v1059 = vmul.f32 %v900, %v1058
  %v1060 = vsub.f32 1.0, %v1059
  %v1061 = vmul.f32 %v1058, %v1060
  %v1062 = vadd.f32 %v1058, %v1061
  %vm1063 = vweird.f32 %v900
  %vm1064 = vweird.f32 %v1058
  %vm1065 = vmor %vm1063, %vm1064
  %v1066 = vsel %vm1065, %v1058, %v1062
  %v1067 = vand.u32 2147483647, %v900
  %vm1068 = vcmp.eq.f32.partialorder %v1067, 8.507059e+37
  %v1069 = vand.u32 %v900, 2147483648
  %v1070 = vor.u32 1.1754944e-38, %v1069
  %v1071 = vsel %vm1068, %v1070, %v1066
  %v1072 = vmul.f32 1.0, %v1071
  %v1073 = vrcp.pop %v901
  %v1074 = vmul.f32 %v901, %v1073
  %v1075 = vsub.f32 1.0, %v1074
  %v1076 = vmul.f32 %v1073, %v1075
  %v1077 = vadd.f32 %v1073, %v1076
  %vm1078 = vweird.f32 %v901
  %vm1079 = vweird.f32 %v1073
  %vm1080 = vmor %vm1078, %vm1079
  %v1081 = vsel %vm1080, %v1073, %v1077
  %v1082 = vand.u32 2147483647, %v901
  %vm1083 = vcmp.eq.f32.partialorder %v1082, 8.507059e+37
  %v1084 = vand.u32 %v901, 2147483648
  %v1085 = vor.u32 1.1754944e-38, %v1084
  %v1086 = vsel %vm1083, %v1085, %v1081
  %v1087 = vmul.f32 1.0, %v1086
  %v1088 = vrcp.pop %v902
  %v1089 = vmul.f32 %v902, %v1088
  %v1090 = vsub.f32 1.0, %v1089
  %v1091 = vmul.f32 %v1088, %v1090
  %v1092 = vadd.f32 %v1088, %v1091
  %vm1093 = vweird.f32 %v902
  %vm1094 = vweird.f32 %v1088
  %vm1095 = vmor %vm1093, %vm1094
  %v1096 = vsel %vm1095, %v1088, %v1092
  %v1097 = vand.u32 2147483647, %v902
  %vm1098 = vcmp.eq.f32.partialorder %v1097, 8.507059e+37
  %v1099 = vand.u32 %v902, 2147483648
  %v1100 = vor.u32 1.1754944e-38, %v1099
  %v1101 = vsel %vm1098, %v1100, %v1096
  %v1102 = vmul.f32 1.0, %v1101
  %v1103 = vrcp.pop %v903
  %v1104 = vmul.f32 %v903, %v1103
  %v1105 = vsub.f32 1.0, %v1104
  %v1106 = vmul.f32 %v1103, %v1105
  %v1107 = vadd.f32 %v1103, %v1106
  %vm1108 = vweird.f32 %v903
  %vm1109 = vweird.f32 %v1103
  %vm1110 = vmor %vm1108, %vm1109
  %v1111 = vsel %vm1110, %v1103, %v1107
  %v1112 = vand.u32 2147483647, %v903
  %vm1113 = vcmp.eq.f32.partialorder %v1112, 8.507059e+37
  %v1114 = vand.u32 %v903, 2147483648
  %v1115 = vor.u32 1.1754944e-38, %v1114
  %v1116 = vsel %vm1113, %v1115, %v1111
  %v1117 = vmul.f32 1.0, %v1116
  %v1118 = vrcp.pop %v904
  %v1119 = vmul.f32 %v904, %v1118
  %v1120 = vsub.f32 1.0, %v1119
  %v1121 = vmul.f32 %v1118, %v1120
  %v1122 = vadd.f32 %v1118, %v1121
  %vm1123 = vweird.f32 %v904
  %vm1124 = vweird.f32 %v1118
  %vm1125 = vmor %vm1123, %vm1124
  %v1126 = vsel %vm1125, %v1118, %v1122
  %v1127 = vand.u32 2147483647, %v904
  %vm1128 = vcmp.eq.f32.partialorder %v1127, 8.507059e+37
  %v1129 = vand.u32 %v904, 2147483648
  %v1130 = vor.u32 1.1754944e-38, %v1129
  %v1131 = vsel %vm1128, %v1130, %v1126
  %v1132 = vmul.f32 1.0, %v1131
  %v1133 = vrcp.pop %v905
  %v1134 = vmul.f32 %v905, %v1133
  %v1135 = vsub.f32 1.0, %v1134
  %v1136 = vmul.f32 %v1133, %v1135
  %v1137 = vadd.f32 %v1133, %v1136
  %vm1138 = vweird.f32 %v905
  %vm1139 = vweird.f32 %v1133
  %vm1140 = vmor %vm1138, %vm1139
  %v1141 = vsel %vm1140, %v1133, %v1137
  %v1142 = vand.u32 2147483647, %v905
  %vm1143 = vcmp.eq.f32.partialorder %v1142, 8.507059e+37
  %v1144 = vand.u32 %v905, 2147483648
  %v1145 = vor.u32 1.1754944e-38, %v1144
  %v1146 = vsel %vm1143, %v1145, %v1141
  %v1147 = vmul.f32 1.0, %v1146
  %v1148 = vrcp.pop %v906
  %v1149 = vmul.f32 %v906, %v1148
  %v1150 = vsub.f32 1.0, %v1149
  %v1151 = vmul.f32 %v1148, %v1150
  %v1152 = vadd.f32 %v1148, %v1151
  %vm1153 = vweird.f32 %v906
  %vm1154 = vweird.f32 %v1148
  %vm1155 = vmor %vm1153, %vm1154
  %v1156 = vsel %vm1155, %v1148, %v1152
  %v1157 = vand.u32 2147483647, %v906
  %vm1158 = vcmp.eq.f32.partialorder %v1157, 8.507059e+37
  %v1159 = vand.u32 %v906, 2147483648
  %v1160 = vor.u32 1.1754944e-38, %v1159
  %v1161 = vsel %vm1158, %v1160, %v1156
  %v1162 = vmul.f32 1.0, %v1161
  %v1163 = vrcp.pop %v907
  %v1164 = vmul.f32 %v907, %v1163
  %v1165 = vsub.f32 1.0, %v1164
  %v1166 = vmul.f32 %v1163, %v1165
  %v1167 = vadd.f32 %v1163, %v1166
  %vm1168 = vweird.f32 %v907
  %vm1169 = vweird.f32 %v1163
  %vm1170 = vmor %vm1168, %vm1169
  %v1171 = vsel %vm1170, %v1163, %v1167
  %v1172 = vand.u32 2147483647, %v907
  %vm1173 = vcmp.eq.f32.partialorder %v1172, 8.507059e+37
  %v1174 = vand.u32 %v907, 2147483648
  %v1175 = vor.u32 1.1754944e-38, %v1174
  %v1176 = vsel %vm1173, %v1175, %v1171
  %v1177 = vmul.f32 1.0, %v1176
  %v1178 = vrcp.pop %v908
  %v1179 = vmul.f32 %v908, %v1178
  %v1180 = vsub.f32 1.0, %v1179
  %v1181 = vmul.f32 %v1178, %v1180
  %v1182 = vadd.f32 %v1178, %v1181
  %vm1183 = vweird.f32 %v908
  %vm1184 = vweird.f32 %v1178
  %vm1185 = vmor %vm1183, %vm1184
  %v1186 = vsel %vm1185, %v1178, %v1182
  %v1187 = vand.u32 2147483647, %v908
  %vm1188 = vcmp.eq.f32.partialorder %v1187, 8.507059e+37
  %v1189 = vand.u32 %v908, 2147483648
  %v1190 = vor.u32 1.1754944e-38, %v1189
  %v1191 = vsel %vm1188, %v1190, %v1186
  %v1192 = vmul.f32 1.0, %v1191
  %v1193 = vrcp.pop %v909
  %v1194 = vmul.f32 %v909, %v1193
  %v1195 = vsub.f32 1.0, %v1194
  %v1196 = vmul.f32 %v1193, %v1195
  %v1197 = vadd.f32 %v1193, %v1196
  %vm1198 = vweird.f32 %v909
  %vm1199 = vweird.f32 %v1193
  %vm1200 = vmor %vm1198, %vm1199
  %v1201 = vsel %vm1200, %v1193, %v1197
  %v1202 = vand.u32 2147483647, %v909
  %vm1203 = vcmp.eq.f32.partialorder %v1202, 8.507059e+37
  %v1204 = vand.u32 %v909, 2147483648
  %v1205 = vor.u32 1.1754944e-38, %v1204
  %v1206 = vsel %vm1203, %v1205, %v1201
  %v1207 = vmul.f32 1.0, %v1206
  %v1208 = vrcp.pop %v910
  %v1209 = vmul.f32 %v910, %v1208
  %v1210 = vsub.f32 1.0, %v1209
  %v1211 = vmul.f32 %v1208, %v1210
  %v1212 = vadd.f32 %v1208, %v1211
  %vm1213 = vweird.f32 %v910
  %vm1214 = vweird.f32 %v1208
  %vm1215 = vmor %vm1213, %vm1214
  %v1216 = vsel %vm1215, %v1208, %v1212
  %v1217 = vand.u32 2147483647, %v910
  %vm1218 = vcmp.eq.f32.partialorder %v1217, 8.507059e+37
  %v1219 = vand.u32 %v910, 2147483648
  %v1220 = vor.u32 1.1754944e-38, %v1219
  %v1221 = vsel %vm1218, %v1220, %v1216
  %v1222 = vmul.f32 1.0, %v1221
  %v1223 = vrcp.pop %v911
  %v1224 = vmul.f32 %v911, %v1223
  %v1225 = vsub.f32 1.0, %v1224
  %v1226 = vmul.f32 %v1223, %v1225
  %v1227 = vadd.f32 %v1223, %v1226
  %vm1228 = vweird.f32 %v911
  %vm1229 = vweird.f32 %v1223
  %vm1230 = vmor %vm1228, %vm1229
  %v1231 = vsel %vm1230, %v1223, %v1227
  %v1232 = vand.u32 2147483647, %v911
  %vm1233 = vcmp.eq.f32.partialorder %v1232, 8.507059e+37
  %v1234 = vand.u32 %v911, 2147483648
  %v1235 = vor.u32 1.1754944e-38, %v1234
  %v1236 = vsel %vm1233, %v1235, %v1231
  %v1237 = vmul.f32 1.0, %v1236
  %v1238 = vrcp.pop %v912
  %v1239 = vmul.f32 %v912, %v1238
  %v1240 = vsub.f32 1.0, %v1239
  %v1241 = vmul.f32 %v1238, %v1240
  %v1242 = vadd.f32 %v1238, %v1241
  %vm1243 = vweird.f32 %v912
  %vm1244 = vweird.f32 %v1238
  %vm1245 = vmor %vm1243, %vm1244
  %v1246 = vsel %vm1245, %v1238, %v1242
  %v1247 = vand.u32 2147483647, %v912
  %vm1248 = vcmp.eq.f32.partialorder %v1247, 8.507059e+37
  %v1249 = vand.u32 %v912, 2147483648
  %v1250 = vor.u32 1.1754944e-38, %v1249
  %v1251 = vsel %vm1248, %v1250, %v1246
  %v1252 = vmul.f32 1.0, %v1251
  %v1253 = vrcp.pop %v913
  %v1254 = vmul.f32 %v913, %v1253
  %v1255 = vsub.f32 1.0, %v1254
  %v1256 = vmul.f32 %v1253, %v1255
  %v1257 = vadd.f32 %v1253, %v1256
  %vm1258 = vweird.f32 %v913
  %vm1259 = vweird.f32 %v1253
  %vm1260 = vmor %vm1258, %vm1259
  %v1261 = vsel %vm1260, %v1253, %v1257
  %v1262 = vand.u32 2147483647, %v913
  %vm1263 = vcmp.eq.f32.partialorder %v1262, 8.507059e+37
  %v1264 = vand.u32 %v913, 2147483648
  %v1265 = vor.u32 1.1754944e-38, %v1264
  %v1266 = vsel %vm1263, %v1265, %v1261
  %v1267 = vmul.f32 1.0, %v1266
  %v1268 = vrcp.pop %v914
  %v1269 = vmul.f32 %v914, %v1268
  %v1270 = vsub.f32 1.0, %v1269
  %v1271 = vmul.f32 %v1268, %v1270
  %v1272 = vadd.f32 %v1268, %v1271
  %vm1273 = vweird.f32 %v914
  %vm1274 = vweird.f32 %v1268
  %vm1275 = vmor %vm1273, %vm1274
  %v1276 = vsel %vm1275, %v1268, %v1272
  %v1277 = vand.u32 2147483647, %v914
  %vm1278 = vcmp.eq.f32.partialorder %v1277, 8.507059e+37
  %v1279 = vand.u32 %v914, 2147483648
  %v1280 = vor.u32 1.1754944e-38, %v1279
  %v1281 = vsel %vm1278, %v1280, %v1276
  %v1282 = vmul.f32 1.0, %v1281
  %v1283 = vrcp.pop %v915
  %v1284 = vmul.f32 %v915, %v1283
  %v1285 = vsub.f32 1.0, %v1284
  %v1286 = vmul.f32 %v1283, %v1285
  %v1287 = vadd.f32 %v1283, %v1286
  %vm1288 = vweird.f32 %v915
  %vm1289 = vweird.f32 %v1283
  %vm1290 = vmor %vm1288, %vm1289
  %v1291 = vsel %vm1290, %v1283, %v1287
  %v1292 = vand.u32 2147483647, %v915
  %vm1293 = vcmp.eq.f32.partialorder %v1292, 8.507059e+37
  %v1294 = vand.u32 %v915, 2147483648
  %v1295 = vor.u32 1.1754944e-38, %v1294
  %v1296 = vsel %vm1293, %v1295, %v1291
  %v1297 = vmul.f32 1.0, %v1296
  %v1298 = vrcp.pop %v916
  %v1299 = vmul.f32 %v916, %v1298
  %v1300 = vsub.f32 1.0, %v1299
  %v1301 = vmul.f32 %v1298, %v1300
  %v1302 = vadd.f32 %v1298, %v1301
  %vm1303 = vweird.f32 %v916
  %vm1304 = vweird.f32 %v1298
  %vm1305 = vmor %vm1303, %vm1304
  %v1306 = vsel %vm1305, %v1298, %v1302
  %v1307 = vand.u32 2147483647, %v916
  %vm1308 = vcmp.eq.f32.partialorder %v1307, 8.507059e+37
  %v1309 = vand.u32 %v916, 2147483648
  %v1310 = vor.u32 1.1754944e-38, %v1309
  %v1311 = vsel %vm1308, %v1310, %v1306
  %v1312 = vmul.f32 1.0, %v1311
  %v1313 = vrcp.pop %v917
  %v1314 = vmul.f32 %v917, %v1313
  %v1315 = vsub.f32 1.0, %v1314
  %v1316 = vmul.f32 %v1313, %v1315
  %v1317 = vadd.f32 %v1313, %v1316
  %vm1318 = vweird.f32 %v917
  %vm1319 = vweird.f32 %v1313
  %vm1320 = vmor %vm1318, %vm1319
  %v1321 = vsel %vm1320, %v1313, %v1317
  %v1322 = vand.u32 2147483647, %v917
  %vm1323 = vcmp.eq.f32.partialorder %v1322, 8.507059e+37
  %v1324 = vand.u32 %v917, 2147483648
  %v1325 = vor.u32 1.1754944e-38, %v1324
  %v1326 = vsel %vm1323, %v1325, %v1321
  %v1327 = vmul.f32 1.0, %v1326
  %v1328 = vrcp.pop %v918
  %v1329 = vmul.f32 %v918, %v1328
  %v1330 = vsub.f32 1.0, %v1329
  %v1331 = vmul.f32 %v1328, %v1330
  %v1332 = vadd.f32 %v1328, %v1331
  %vm1333 = vweird.f32 %v918
  %vm1334 = vweird.f32 %v1328
  %vm1335 = vmor %vm1333, %vm1334
  %v1336 = vsel %vm1335, %v1328, %v1332
  %v1337 = vand.u32 2147483647, %v918
  %vm1338 = vcmp.eq.f32.partialorder %v1337, 8.507059e+37
  %v1339 = vand.u32 %v918, 2147483648
  %v1340 = vor.u32 1.1754944e-38, %v1339
  %v1341 = vsel %vm1338, %v1340, %v1336
  %v1342 = vmul.f32 1.0, %v1341
  %v1343 = vrcp.pop %v919
  %v1344 = vmul.f32 %v919, %v1343
  %v1345 = vsub.f32 1.0, %v1344
  %v1346 = vmul.f32 %v1343, %v1345
  %v1347 = vadd.f32 %v1343, %v1346
  %vm1348 = vweird.f32 %v919
  %vm1349 = vweird.f32 %v1343
  %vm1350 = vmor %vm1348, %vm1349
  %v1351 = vsel %vm1350, %v1343, %v1347
  %v1352 = vand.u32 2147483647, %v919
  %vm1353 = vcmp.eq.f32.partialorder %v1352, 8.507059e+37
  %v1354 = vand.u32 %v919, 2147483648
  %v1355 = vor.u32 1.1754944e-38, %v1354
  %v1356 = vsel %vm1353, %v1355, %v1351
  %v1357 = vmul.f32 1.0, %v1356
  %v1358 = vrcp.pop %v920
  %v1359 = vmul.f32 %v920, %v1358
  %v1360 = vsub.f32 1.0, %v1359
  %v1361 = vmul.f32 %v1358, %v1360
  %v1362 = vadd.f32 %v1358, %v1361
  %vm1363 = vweird.f32 %v920
  %vm1364 = vweird.f32 %v1358
  %vm1365 = vmor %vm1363, %vm1364
  %v1366 = vsel %vm1365, %v1358, %v1362
  %v1367 = vand.u32 2147483647, %v920
  %vm1368 = vcmp.eq.f32.partialorder %v1367, 8.507059e+37
  %v1369 = vand.u32 %v920, 2147483648
  %v1370 = vor.u32 1.1754944e-38, %v1369
  %v1371 = vsel %vm1368, %v1370, %v1366
  %v1372 = vmul.f32 1.0, %v1371
  %v1373 = vrcp.pop %v921
  %v1374 = vmul.f32 %v921, %v1373
  %v1375 = vsub.f32 1.0, %v1374
  %v1376 = vmul.f32 %v1373, %v1375
  %v1377 = vadd.f32 %v1373, %v1376
  %vm1378 = vweird.f32 %v921
  %vm1379 = vweird.f32 %v1373
  %vm1380 = vmor %vm1378, %vm1379
  %v1381 = vsel %vm1380, %v1373, %v1377
  %v1382 = vand.u32 2147483647, %v921
  %vm1383 = vcmp.eq.f32.partialorder %v1382, 8.507059e+37
  %v1384 = vand.u32 %v921, 2147483648
  %v1385 = vor.u32 1.1754944e-38, %v1384
  %v1386 = vsel %vm1383, %v1385, %v1381
  %v1387 = vmul.f32 1.0, %v1386
  %v1388 = vrcp.pop %v922
  %v1389 = vmul.f32 %v922, %v1388
  %v1390 = vsub.f32 1.0, %v1389
  %v1391 = vmul.f32 %v1388, %v1390
  %v1392 = vadd.f32 %v1388, %v1391
  %vm1393 = vweird.f32 %v922
  %vm1394 = vweird.f32 %v1388
  %vm1395 = vmor %vm1393, %vm1394
  %v1396 = vsel %vm1395, %v1388, %v1392
  %v1397 = vand.u32 2147483647, %v922
  %vm1398 = vcmp.eq.f32.partialorder %v1397, 8.507059e+37
  %v1399 = vand.u32 %v922, 2147483648
  %v1400 = vor.u32 1.1754944e-38, %v1399
  %v1401 = vsel %vm1398, %v1400, %v1396
  %v1402 = vmul.f32 1.0, %v1401
  %1404 = vset.pattern.permute.xlu0 0
  %1405 = vperm.xlu0 %1404, %v937
  %v1406 = vpop.permute.xlu0 %1405
  %1409 = vset.pattern.permute.xlu0 0
  %1410 = vperm.xlu0 %1409, %v952
  %v1411 = vpop.permute.xlu0 %1410
  %1414 = vset.pattern.permute.xlu0 0
  %1415 = vperm.xlu0 %1414, %v967
  %v1416 = vpop.permute.xlu0 %1415
  %1419 = vset.pattern.permute.xlu0 0
  %1420 = vperm.xlu0 %1419, %v982
  %v1421 = vpop.permute.xlu0 %1420
  %1424 = vset.pattern.permute.xlu0 0
  %1425 = vperm.xlu0 %1424, %v997
  %v1426 = vpop.permute.xlu0 %1425
  %1429 = vset.pattern.permute.xlu0 0
  %1430 = vperm.xlu0 %1429, %v1012
  %v1431 = vpop.permute.xlu0 %1430
  %1434 = vset.pattern.permute.xlu0 0
  %1435 = vperm.xlu0 %1434, %v1027
  %v1436 = vpop.permute.xlu0 %1435
  %1439 = vset.pattern.permute.xlu0 0
  %1440 = vperm.xlu0 %1439, %v1042
  %v1441 = vpop.permute.xlu0 %1440
  %1444 = vset.pattern.permute.xlu0 0
  %1445 = vperm.xlu0 %1444, %v1057
  %v1446 = vpop.permute.xlu0 %1445
  %1449 = vset.pattern.permute.xlu0 0
  %1450 = vperm.xlu0 %1449, %v1072
  %v1451 = vpop.permute.xlu0 %1450
  %1454 = vset.pattern.permute.xlu0 0
  %1455 = vperm.xlu0 %1454, %v1087
  %v1456 = vpop.permute.xlu0 %1455
  %1459 = vset.pattern.permute.xlu0 0
  %1460 = vperm.xlu0 %1459, %v1102
  %v1461 = vpop.permute.xlu0 %1460
  %1464 = vset.pattern.permute.xlu0 0
  %1465 = vperm.xlu0 %1464, %v1117
  %v1466 = vpop.permute.xlu0 %1465
  %1469 = vset.pattern.permute.xlu0 0
  %1470 = vperm.xlu0 %1469, %v1132
  %v1471 = vpop.permute.xlu0 %1470
  %1474 = vset.pattern.permute.xlu0 0
  %1475 = vperm.xlu0 %1474, %v1147
  %v1476 = vpop.permute.xlu0 %1475
  %1479 = vset.pattern.permute.xlu0 0
  %1480 = vperm.xlu0 %1479, %v1162
  %v1481 = vpop.permute.xlu0 %1480
  %1484 = vset.pattern.permute.xlu0 0
  %1485 = vperm.xlu0 %1484, %v1177
  %v1486 = vpop.permute.xlu0 %1485
  %1489 = vset.pattern.permute.xlu0 0
  %1490 = vperm.xlu0 %1489, %v1192
  %v1491 = vpop.permute.xlu0 %1490
  %1494 = vset.pattern.permute.xlu0 0
  %1495 = vperm.xlu0 %1494, %v1207
  %v1496 = vpop.permute.xlu0 %1495
  %1499 = vset.pattern.permute.xlu0 0
  %1500 = vperm.xlu0 %1499, %v1222
  %v1501 = vpop.permute.xlu0 %1500
  %1504 = vset.pattern.permute.xlu0 0
  %1505 = vperm.xlu0 %1504, %v1237
  %v1506 = vpop.permute.xlu0 %1505
  %1509 = vset.pattern.permute.xlu0 0
  %1510 = vperm.xlu0 %1509, %v1252
  %v1511 = vpop.permute.xlu0 %1510
  %1514 = vset.pattern.permute.xlu0 0
  %1515 = vperm.xlu0 %1514, %v1267
  %v1516 = vpop.permute.xlu0 %1515
  %1519 = vset.pattern.permute.xlu0 0
  %1520 = vperm.xlu0 %1519, %v1282
  %v1521 = vpop.permute.xlu0 %1520
  %1524 = vset.pattern.permute.xlu0 0
  %1525 = vperm.xlu0 %1524, %v1297
  %v1526 = vpop.permute.xlu0 %1525
  %1529 = vset.pattern.permute.xlu0 0
  %1530 = vperm.xlu0 %1529, %v1312
  %v1531 = vpop.permute.xlu0 %1530
  %1534 = vset.pattern.permute.xlu0 0
  %1535 = vperm.xlu0 %1534, %v1327
  %v1536 = vpop.permute.xlu0 %1535
  %1539 = vset.pattern.permute.xlu0 0
  %1540 = vperm.xlu0 %1539, %v1342
  %v1541 = vpop.permute.xlu0 %1540
  %1544 = vset.pattern.permute.xlu0 0
  %1545 = vperm.xlu0 %1544, %v1357
  %v1546 = vpop.permute.xlu0 %1545
  %1549 = vset.pattern.permute.xlu0 0
  %1550 = vperm.xlu0 %1549, %v1372
  %v1551 = vpop.permute.xlu0 %1550
  %1554 = vset.pattern.permute.xlu0 0
  %1555 = vperm.xlu0 %1554, %v1387
  %v1556 = vpop.permute.xlu0 %1555
  %1559 = vset.pattern.permute.xlu0 0
  %1560 = vperm.xlu0 %1559, %v1402
  %v1561 = vpop.permute.xlu0 %1560
  %v1563 = vmul.f32 %v282, %v1406
  %v1564 = vmul.f32 %v283, %v1406
  %v1565 = vmul.f32 %v284, %v1411
  %v1566 = vmul.f32 %v285, %v1411
  %v1567 = vmul.f32 %v286, %v1416
  %v1568 = vmul.f32 %v287, %v1416
  %v1569 = vmul.f32 %v288, %v1421
  %v1570 = vmul.f32 %v289, %v1421
  %v1571 = vmul.f32 %v290, %v1426
  %v1572 = vmul.f32 %v291, %v1426
  %v1573 = vmul.f32 %v292, %v1431
  %v1574 = vmul.f32 %v293, %v1431
  %v1575 = vmul.f32 %v294, %v1436
  %v1576 = vmul.f32 %v295, %v1436
  %v1577 = vmul.f32 %v296, %v1441
  %v1578 = vmul.f32 %v297, %v1441
  %v1579 = vmul.f32 %v298, %v1446
  %v1580 = vmul.f32 %v299, %v1446
  %v1581 = vmul.f32 %v300, %v1451
  %v1582 = vmul.f32 %v301, %v1451
  %v1583 = vmul.f32 %v302, %v1456
  %v1584 = vmul.f32 %v303, %v1456
  %v1585 = vmul.f32 %v304, %v1461
  %v1586 = vmul.f32 %v305, %v1461
  %v1587 = vmul.f32 %v306, %v1466
  %v1588 = vmul.f32 %v307, %v1466
  %v1589 = vmul.f32 %v308, %v1471
  %v1590 = vmul.f32 %v309, %v1471
  %v1591 = vmul.f32 %v310, %v1476
  %v1592 = vmul.f32 %v311, %v1476
  %v1593 = vmul.f32 %v312, %v1481
  %v1594 = vmul.f32 %v313, %v1481
  %v1595 = vmul.f32 %v314, %v1486
  %v1596 = vmul.f32 %v315, %v1486
  %v1597 = vmul.f32 %v316, %v1491
  %v1598 = vmul.f32 %v317, %v1491
  %v1599 = vmul.f32 %v318, %v1496
  %v1600 = vmul.f32 %v319, %v1496
  %v1601 = vmul.f32 %v320, %v1501
  %v1602 = vmul.f32 %v321, %v1501
  %v1603 = vmul.f32 %v322, %v1506
  %v1604 = vmul.f32 %v323, %v1506
  %v1605 = vmul.f32 %v324, %v1511
  %v1606 = vmul.f32 %v325, %v1511
  %v1607 = vmul.f32 %v326, %v1516
  %v1608 = vmul.f32 %v327, %v1516
  %v1609 = vmul.f32 %v328, %v1521
  %v1610 = vmul.f32 %v329, %v1521
  %v1611 = vmul.f32 %v330, %v1526
  %v1612 = vmul.f32 %v331, %v1526
  %v1613 = vmul.f32 %v332, %v1531
  %v1614 = vmul.f32 %v333, %v1531
  %v1615 = vmul.f32 %v334, %v1536
  %v1616 = vmul.f32 %v335, %v1536
  %v1617 = vmul.f32 %v336, %v1541
  %v1618 = vmul.f32 %v337, %v1541
  %v1619 = vmul.f32 %v338, %v1546
  %v1620 = vmul.f32 %v339, %v1546
  %v1621 = vmul.f32 %v340, %v1551
  %v1622 = vmul.f32 %v341, %v1551
  %v1623 = vmul.f32 %v342, %v1556
  %v1624 = vmul.f32 %v343, %v1556
  %v1625 = vmul.f32 %v344, %v1561
  %v1626 = vmul.f32 %v345, %v1561
  %v1627 = vld [vmem:[%s2] sm:$0xff]
  %v1628 = vld [vmem:[%s2 + $0x8] sm:$0xff]
  %v1629 = vld [vmem:[%s2 + $0x10] sm:$0xff]
  %v1630 = vld [vmem:[%s2 + $0x18] sm:$0xff]
  %v1631 = vld [vmem:[%s2 + $0x20] sm:$0xff]
  %v1632 = vld [vmem:[%s2 + $0x28] sm:$0xff]
  %v1633 = vld [vmem:[%s2 + $0x30] sm:$0xff]
  %v1634 = vld [vmem:[%s2 + $0x38] sm:$0xff]
  %v1635 = vld [vmem:[%s2 + $0x40] sm:$0xff]
  %v1636 = vld [vmem:[%s2 + $0x48] sm:$0xff]
  %v1637 = vld [vmem:[%s2 + $0x50] sm:$0xff]
  %v1638 = vld [vmem:[%s2 + $0x58] sm:$0xff]
  %v1639 = vld [vmem:[%s2 + $0x60] sm:$0xff]
  %v1640 = vld [vmem:[%s2 + $0x68] sm:$0xff]
  %v1641 = vld [vmem:[%s2 + $0x70] sm:$0xff]
  %v1642 = vld [vmem:[%s2 + $0x78] sm:$0xff]
  %v1643 = vld [vmem:[%s2 + $0x80] sm:$0xff]
  %v1644 = vld [vmem:[%s2 + $0x88] sm:$0xff]
  %v1645 = vld [vmem:[%s2 + $0x90] sm:$0xff]
  %v1646 = vld [vmem:[%s2 + $0x98] sm:$0xff]
  %v1647 = vld [vmem:[%s2 + $0xa0] sm:$0xff]
  %v1648 = vld [vmem:[%s2 + $0xa8] sm:$0xff]
  %v1649 = vld [vmem:[%s2 + $0xb0] sm:$0xff]
  %v1650 = vld [vmem:[%s2 + $0xb8] sm:$0xff]
  %v1651 = vld [vmem:[%s2 + $0xc0] sm:$0xff]
  %v1652 = vld [vmem:[%s2 + $0xc8] sm:$0xff]
  %v1653 = vld [vmem:[%s2 + $0xd0] sm:$0xff]
  %v1654 = vld [vmem:[%s2 + $0xd8] sm:$0xff]
  %v1655 = vld [vmem:[%s2 + $0xe0] sm:$0xff]
  %v1656 = vld [vmem:[%s2 + $0xe8] sm:$0xff]
  %v1657 = vld [vmem:[%s2 + $0xf0] sm:$0xff]
  %v1658 = vld [vmem:[%s2 + $0xf8] sm:$0xff]
  %v1659 = vld [vmem:[%s2 + $0x100] sm:$0xff]
  %v1660 = vld [vmem:[%s2 + $0x108] sm:$0xff]
  %v1661 = vld [vmem:[%s2 + $0x110] sm:$0xff]
  %v1662 = vld [vmem:[%s2 + $0x118] sm:$0xff]
  %v1663 = vld [vmem:[%s2 + $0x120] sm:$0xff]
  %v1664 = vld [vmem:[%s2 + $0x128] sm:$0xff]
  %v1665 = vld [vmem:[%s2 + $0x130] sm:$0xff]
  %v1666 = vld [vmem:[%s2 + $0x138] sm:$0xff]
  %v1667 = vld [vmem:[%s2 + $0x140] sm:$0xff]
  %v1668 = vld [vmem:[%s2 + $0x148] sm:$0xff]
  %v1669 = vld [vmem:[%s2 + $0x150] sm:$0xff]
  %v1670 = vld [vmem:[%s2 + $0x158] sm:$0xff]
  %v1671 = vld [vmem:[%s2 + $0x160] sm:$0xff]
  %v1672 = vld [vmem:[%s2 + $0x168] sm:$0xff]
  %v1673 = vld [vmem:[%s2 + $0x170] sm:$0xff]
  %v1674 = vld [vmem:[%s2 + $0x178] sm:$0xff]
  %v1675 = vld [vmem:[%s2 + $0x180] sm:$0xff]
  %v1676 = vld [vmem:[%s2 + $0x188] sm:$0xff]
  %v1677 = vld [vmem:[%s2 + $0x190] sm:$0xff]
  %v1678 = vld [vmem:[%s2 + $0x198] sm:$0xff]
  %v1679 = vld [vmem:[%s2 + $0x1a0] sm:$0xff]
  %v1680 = vld [vmem:[%s2 + $0x1a8] sm:$0xff]
  %v1681 = vld [vmem:[%s2 + $0x1b0] sm:$0xff]
  %v1682 = vld [vmem:[%s2 + $0x1b8] sm:$0xff]
  %v1683 = vld [vmem:[%s2 + $0x1c0] sm:$0xff]
  %v1684 = vld [vmem:[%s2 + $0x1c8] sm:$0xff]
  %v1685 = vld [vmem:[%s2 + $0x1d0] sm:$0xff]
  %v1686 = vld [vmem:[%s2 + $0x1d8] sm:$0xff]
  %v1687 = vld [vmem:[%s2 + $0x1e0] sm:$0xff]
  %v1688 = vld [vmem:[%s2 + $0x1e8] sm:$0xff]
  %v1689 = vld [vmem:[%s2 + $0x1f0] sm:$0xff]
  %v1690 = vld [vmem:[%s2 + $0x1f8] sm:$0xff]
  %v1691 = vadd.f32 %v1563, %v1627
  %v1692 = vadd.f32 %v1564, %v1628
  %v1693 = vadd.f32 %v1565, %v1629
  %v1694 = vadd.f32 %v1566, %v1630
  %v1695 = vadd.f32 %v1567, %v1631
  %v1696 = vadd.f32 %v1568, %v1632
  %v1697 = vadd.f32 %v1569, %v1633
  %v1698 = vadd.f32 %v1570, %v1634
  %v1699 = vadd.f32 %v1571, %v1635
  %v1700 = vadd.f32 %v1572, %v1636
  %v1701 = vadd.f32 %v1573, %v1637
  %v1702 = vadd.f32 %v1574, %v1638
  %v1703 = vadd.f32 %v1575, %v1639
  %v1704 = vadd.f32 %v1576, %v1640
  %v1705 = vadd.f32 %v1577, %v1641
  %v1706 = vadd.f32 %v1578, %v1642
  %v1707 = vadd.f32 %v1579, %v1643
  %v1708 = vadd.f32 %v1580, %v1644
  %v1709 = vadd.f32 %v1581, %v1645
  %v1710 = vadd.f32 %v1582, %v1646
  %v1711 = vadd.f32 %v1583, %v1647
  %v1712 = vadd.f32 %v1584, %v1648
  %v1713 = vadd.f32 %v1585, %v1649
  %v1714 = vadd.f32 %v1586, %v1650
  %v1715 = vadd.f32 %v1587, %v1651
  %v1716 = vadd.f32 %v1588, %v1652
  %v1717 = vadd.f32 %v1589, %v1653
  %v1718 = vadd.f32 %v1590, %v1654
  %v1719 = vadd.f32 %v1591, %v1655
  %v1720 = vadd.f32 %v1592, %v1656
  %v1721 = vadd.f32 %v1593, %v1657
  %v1722 = vadd.f32 %v1594, %v1658
  %v1723 = vadd.f32 %v1595, %v1659
  %v1724 = vadd.f32 %v1596, %v1660
  %v1725 = vadd.f32 %v1597, %v1661
  %v1726 = vadd.f32 %v1598, %v1662
  %v1727 = vadd.f32 %v1599, %v1663
  %v1728 = vadd.f32 %v1600, %v1664
  %v1729 = vadd.f32 %v1601, %v1665
  %v1730 = vadd.f32 %v1602, %v1666
  %v1731 = vadd.f32 %v1603, %v1667
  %v1732 = vadd.f32 %v1604, %v1668
  %v1733 = vadd.f32 %v1605, %v1669
  %v1734 = vadd.f32 %v1606, %v1670
  %v1735 = vadd.f32 %v1607, %v1671
  %v1736 = vadd.f32 %v1608, %v1672
  %v1737 = vadd.f32 %v1609, %v1673
  %v1738 = vadd.f32 %v1610, %v1674
  %v1739 = vadd.f32 %v1611, %v1675
  %v1740 = vadd.f32 %v1612, %v1676
  %v1741 = vadd.f32 %v1613, %v1677
  %v1742 = vadd.f32 %v1614, %v1678
  %v1743 = vadd.f32 %v1615, %v1679
  %v1744 = vadd.f32 %v1616, %v1680
  %v1745 = vadd.f32 %v1617, %v1681
  %v1746 = vadd.f32 %v1618, %v1682
  %v1747 = vadd.f32 %v1619, %v1683
  %v1748 = vadd.f32 %v1620, %v1684
  %v1749 = vadd.f32 %v1621, %v1685
  %v1750 = vadd.f32 %v1622, %v1686
  %v1751 = vadd.f32 %v1623, %v1687
  %v1752 = vadd.f32 %v1624, %v1688
  %v1753 = vadd.f32 %v1625, %v1689
  %v1754 = vadd.f32 %v1626, %v1690
  %1755 = vst [vmem:[%s7] sm:$0xff] %v1691
  %1756 = vst [vmem:[%s7 + $0x8] sm:$0xff] %v1692
  %1757 = vst [vmem:[%s7 + $0x10] sm:$0xff] %v1693
  %1758 = vst [vmem:[%s7 + $0x18] sm:$0xff] %v1694
  %1759 = vst [vmem:[%s7 + $0x20] sm:$0xff] %v1695
  %1760 = vst [vmem:[%s7 + $0x28] sm:$0xff] %v1696
  %1761 = vst [vmem:[%s7 + $0x30] sm:$0xff] %v1697
  %1762 = vst [vmem:[%s7 + $0x38] sm:$0xff] %v1698
  %1763 = vst [vmem:[%s7 + $0x40] sm:$0xff] %v1699
  %1764 = vst [vmem:[%s7 + $0x48] sm:$0xff] %v1700
  %1765 = vst [vmem:[%s7 + $0x50] sm:$0xff] %v1701
  %1766 = vst [vmem:[%s7 + $0x58] sm:$0xff] %v1702
  %1767 = vst [vmem:[%s7 + $0x60] sm:$0xff] %v1703
  %1768 = vst [vmem:[%s7 + $0x68] sm:$0xff] %v1704
  %1769 = vst [vmem:[%s7 + $0x70] sm:$0xff] %v1705
  %1770 = vst [vmem:[%s7 + $0x78] sm:$0xff] %v1706
  %1771 = vst [vmem:[%s7 + $0x80] sm:$0xff] %v1707
  %1772 = vst [vmem:[%s7 + $0x88] sm:$0xff] %v1708
  %1773 = vst [vmem:[%s7 + $0x90] sm:$0xff] %v1709
  %1774 = vst [vmem:[%s7 + $0x98] sm:$0xff] %v1710
  %1775 = vst [vmem:[%s7 + $0xa0] sm:$0xff] %v1711
  %1776 = vst [vmem:[%s7 + $0xa8] sm:$0xff] %v1712
  %1777 = vst [vmem:[%s7 + $0xb0] sm:$0xff] %v1713
  %1778 = vst [vmem:[%s7 + $0xb8] sm:$0xff] %v1714
  %1779 = vst [vmem:[%s7 + $0xc0] sm:$0xff] %v1715
  %1780 = vst [vmem:[%s7 + $0xc8] sm:$0xff] %v1716
  %1781 = vst [vmem:[%s7 + $0xd0] sm:$0xff] %v1717
  %1782 = vst [vmem:[%s7 + $0xd8] sm:$0xff] %v1718
  %1783 = vst [vmem:[%s7 + $0xe0] sm:$0xff] %v1719
  %1784 = vst [vmem:[%s7 + $0xe8] sm:$0xff] %v1720
  %1785 = vst [vmem:[%s7 + $0xf0] sm:$0xff] %v1721
  %1786 = vst [vmem:[%s7 + $0xf8] sm:$0xff] %v1722
  %1787 = vst [vmem:[%s7 + $0x100] sm:$0xff] %v1723
  %1788 = vst [vmem:[%s7 + $0x108] sm:$0xff] %v1724
  %1789 = vst [vmem:[%s7 + $0x110] sm:$0xff] %v1725
  %1790 = vst [vmem:[%s7 + $0x118] sm:$0xff] %v1726
  %1791 = vst [vmem:[%s7 + $0x120] sm:$0xff] %v1727
  %1792 = vst [vmem:[%s7 + $0x128] sm:$0xff] %v1728
  %1793 = vst [vmem:[%s7 + $0x130] sm:$0xff] %v1729
  %1794 = vst [vmem:[%s7 + $0x138] sm:$0xff] %v1730
  %1795 = vst [vmem:[%s7 + $0x140] sm:$0xff] %v1731
  %1796 = vst [vmem:[%s7 + $0x148] sm:$0xff] %v1732
  %1797 = vst [vmem:[%s7 + $0x150] sm:$0xff] %v1733
  %1798 = vst [vmem:[%s7 + $0x158] sm:$0xff] %v1734
  %1799 = vst [vmem:[%s7 + $0x160] sm:$0xff] %v1735
  %1800 = vst [vmem:[%s7 + $0x168] sm:$0xff] %v1736
  %1801 = vst [vmem:[%s7 + $0x170] sm:$0xff] %v1737
  %1802 = vst [vmem:[%s7 + $0x178] sm:$0xff] %v1738
  %1803 = vst [vmem:[%s7 + $0x180] sm:$0xff] %v1739
  %1804 = vst [vmem:[%s7 + $0x188] sm:$0xff] %v1740
  %1805 = vst [vmem:[%s7 + $0x190] sm:$0xff] %v1741
  %1806 = vst [vmem:[%s7 + $0x198] sm:$0xff] %v1742
  %1807 = vst [vmem:[%s7 + $0x1a0] sm:$0xff] %v1743
  %1808 = vst [vmem:[%s7 + $0x1a8] sm:$0xff] %v1744
  %1809 = vst [vmem:[%s7 + $0x1b0] sm:$0xff] %v1745
  %1810 = vst [vmem:[%s7 + $0x1b8] sm:$0xff] %v1746
  %1811 = vst [vmem:[%s7 + $0x1c0] sm:$0xff] %v1747
  %1812 = vst [vmem:[%s7 + $0x1c8] sm:$0xff] %v1748
  %1813 = vst [vmem:[%s7 + $0x1d0] sm:$0xff] %v1749
  %1814 = vst [vmem:[%s7 + $0x1d8] sm:$0xff] %v1750
  %1815 = vst [vmem:[%s7 + $0x1e0] sm:$0xff] %v1751
  %1816 = vst [vmem:[%s7 + $0x1e8] sm:$0xff] %v1752
  %1817 = vst [vmem:[%s7 + $0x1f0] sm:$0xff] %v1753
  %1818 = vst [vmem:[%s7 + $0x1f8] sm:$0xff] %v1754
  // Predicated region
  $region30: #{mscn_block.1} parent=0 // pred_check
    _
  $region31: #{mscn_block.1} parent=0 // pred_check_branch
    %1820 = sbr.rel (0) target = $region33
  $region32: #{mscn_block.1} parent=0 // pred_region
    _
  $region33: #{mscn_block.1} parent=0 // pred_fallthru
    _
  // Predicated region
  $region34: #{mscn_block.1} parent=0 // pred_check
    _
  $region35: #{mscn_block.1} parent=0 // pred_check_branch
    %1822 = sbr.rel (0) target = $region37
  $region36: #{mscn_block.1} parent=0 // pred_region
    _
  $region37: #{mscn_block.1} parent=0 // pred_fallthru
    _

</llo_original>
